<compile_context>
chip_gen: v6e
topology: v6e:2x2x1
jax: 0.10.0
libtpu: 0.0.40
codegen_flags: <defaults>
</compile_context>

<pallas_src>
import math

import jax
import jax.numpy as jnp
from jax.experimental import pallas as pl
from jax.experimental.pallas import tpu as pltpu

SQRT2 = math.sqrt(2.0)

_MAX_TILE_ROWS = 64  # per-tile batch rows: bounds transpose unroll + VMEM footprint


# ---------------------------------------------------------------------------
# Fused kernel: feat_extractor + asset_extractor + policy/value heads.
# One grid step handles one batch tile (default: the full batch on 1-TC chips).
# ---------------------------------------------------------------------------
def _fused_kernel(alphas_ref, x_ref, w1_ref, b1_ref, w2_ref, b2_ref,
                  w3_ref, b3_ref, w4_ref, b4_ref, wh_ref, bh_ref, apv_ref,
                  out_ref, pre_ref, flat_ref):
    TB = out_ref.shape[0]            # batch tile
    A = w3_ref.shape[0]              # num_assets
    E = w2_ref.shape[1]              # asset_embed_dim (32)

    # ---- swapaxes(-1,-2) of the native-layout input, done in-kernel (XLU) ----
    # x_ref block is (TB, F, A); build (TB*A, F) so the feat matmuls run
    # batch-folded at M = TB*A rows.
    x2d = jnp.concatenate([x_ref[tb].T for tb in range(TB)], axis=0)   # (TB*A, F)

    # ---- feat_extractor, batch folded into MXU M dimension (TB*A rows) ----
    h1 = jnp.maximum(
        jnp.dot(x2d, w1_ref[...], preferred_element_type=jnp.float32)
        + b1_ref[...], 0.0)                                            # (TB*A, 256)
    e = jnp.tanh(
        (jnp.dot(h1, w2_ref[...], preferred_element_type=jnp.float32)
         + b2_ref[...]) * alphas_ref[0]) * SQRT2                       # (TB*A, E)

    # ---- swapaxes(-1,-2): per-batch 2-D transpose + sublane concat, keeping
    #      the asset matmuls batch-folded at M = TB*E rows. ----
    et = jnp.concatenate(
        [e[tb * A:(tb + 1) * A, :].T for tb in range(TB)], axis=0)     # (TB*E, A)

    # ---- asset_extractor (pre-activation only; ScaledTanh applied after the
    #      flatten so it runs lane-dense) ----
    h2 = jnp.maximum(
        jnp.dot(et, w3_ref[...], preferred_element_type=jnp.float32)
        + b3_ref[...], 0.0)                                            # (TB*E, 128)
    pre_ref[...] = (jnp.dot(h2, w4_ref[...], preferred_element_type=jnp.float32)
                    + b4_ref[...])                                     # (TB*E, A)

    # ---- flatten(1): (TB, E, A) -> (TB, E*A) lane-dense, via strided sublane
    #      reads of the 2-D pre-activation scratch (no 3-D staging buffer). ----
    for c in range(E):                                 # static unroll (E = 32)
        flat_ref[:, c * A:(c + 1) * A] = pre_ref[pl.ds(c, TB, stride=E), :]

    # asset ScaledTanh on the lane-dense (TB, E*A) value
    flat = jnp.tanh(flat_ref[...] * alphas_ref[1]) * SQRT2             # (TB, E*A)

    # ---- merged policy/value heads: one MXU push with N = 2*latent = 128 ----
    heads = (jnp.dot(flat, wh_ref[...], preferred_element_type=jnp.float32)
             + bh_ref[...])                                            # (TB, 128)
    # per-head alpha row precomputed in the wrapper -> no iota/where per step
    out_ref[...] = jnp.tanh(heads * apv_ref[...]) * SQRT2              # lane-dense


# ---------------------------------------------------------------------------
# Batch-tile selection + VMEM budget helpers
# ---------------------------------------------------------------------------
def _num_tensorcores():
    try:
        kind = jax.devices()[0].device_kind.lower()
        return 2 if ("v7" in kind or "7x" in kind) else 1
    except Exception:  # pragma: no cover
        return 1


def _pick_batch_tile(B, A):
    # Biggest tile up to the cap (fills MXU M = TB*A rows, avoids per-step
    # overhead on single-TC chips) that divides B and keeps the (TB, 128)
    # output block sublane-legal (TB == B or TB % 8 == 0).
    cap = min(B, _MAX_TILE_ROWS)
    if _num_tensorcores() > 1:
        # v7x: leave >= 2 grid steps so the "parallel" batch axis can be
        # sharded across both TensorCores.
        cap = min(cap, max(1, B // 2))
    best = B  # fallback: whole batch in one step (always a legal block)
    for tb in range(cap, 0, -1):
        if B % tb == 0 and (tb == B or tb % 8 == 0):
            best = tb
            break
    return best


def _vmem_limit_bytes(TB, F, A, E, latent):
    f32 = 4
    lane = lambda n: -(-n // 128) * 128
    sub = lambda n: -(-n // 8) * 8
    weights = (sub(F) * 256 + 256 * lane(E) + sub(A) * 128 + 128 * lane(A)
               + sub(E * A) * lane(2 * latent) + 6 * lane(256)) * f32
    acts = TB * (A * (lane(F) + 256 + lane(E))        # x2d, h1, e
                 + E * (3 * lane(A))                  # et, h2, pre
                 + 2 * lane(E * A)) * f32             # flat scratch + flat value
    blocks = 2 * TB * (sub(F) * lane(A) + lane(2 * latent)) * f32  # dbl-buffered x/out
    est = 2 * (weights + acts + blocks) + (2 << 20)
    # Never below the default scoped limit; stay under v7x's 64 MiB physical VMEM.
    return int(min(max(est, 32 << 20), 56 << 20))


# ---------------------------------------------------------------------------
# Wrapper
# ---------------------------------------------------------------------------
def mlp_extractor_forward(x, params, *, embed_dim=32, latent_dim=64,
                          batch_tile=None):
    B, F, A = x.shape
    E = embed_dim
    # Alignment assumptions of the in-kernel transpose / lane-dense flatten.
    assert A % 8 == 0, "num_assets must be a multiple of 8 (sublane alignment)"
    assert (E * A) % 128 == 0, "embed_dim*num_assets must be a multiple of 128"

    TB = _pick_batch_tile(B, A) if batch_tile is None else batch_tile
    assert B % TB == 0, "batch must be divisible by batch_tile"

    # Merge policy/value head weights -> single (E*A, 128) matmul in-kernel.
    wh = jnp.concatenate([params["wp"], params["wv"]], axis=1)       # (E*A, 2L)
    bh = jnp.concatenate([params["bp"], params["bv"]], axis=1)       # (1, 2L)
    alphas = params["alphas"]
    # Per-head ScaledTanh alpha row (policy | value), built once in XLA.
    alpha_pv = jnp.concatenate(
        [jnp.full((1, latent_dim), alphas[2], jnp.float32),
         jnp.full((1, latent_dim), alphas[3], jnp.float32)], axis=1)  # (1, 2L)

    smem_spec = pl.BlockSpec(memory_space=pltpu.MemorySpace.SMEM)

    def full2d(shape):
        # Weights/biases: resident, same block every grid step.
        # (pipeline_mode=pl.Buffered(1) could drop their double buffer when TB
        #  is pushed to the VMEM ceiling; left at default here.)
        return pl.BlockSpec(shape, lambda i: (0, 0))

    flops = 2 * B * (A * F * 256 + A * 256 * E
                     + E * A * 128 + E * 128 * A
                     + E * A * 2 * latent_dim)
    transcendentals = B * (A * E + E * A + 2 * latent_dim)
    bytes_accessed = 4 * (B * F * A + F * 256 + 256 + 256 * E + E
                          + A * 128 + 128 + 128 * A + A
                          + E * A * 2 * latent_dim + 2 * latent_dim
                          + B * 2 * latent_dim)

    heads = pl.pallas_call(
        _fused_kernel,
        out_shape=jax.ShapeDtypeStruct((B, 2 * latent_dim), jnp.float32),
        grid=(B // TB,),
        in_specs=[
            smem_spec,                                        # alphas (SMEM)
            pl.BlockSpec((TB, F, A), lambda i: (i, 0, 0)),    # x, native layout
            full2d((F, 256)), full2d((1, 256)),               # feat layer 1
            full2d((256, E)), full2d((1, E)),                 # feat layer 2
            full2d((A, 128)), full2d((1, 128)),               # asset layer 1
            full2d((128, A)), full2d((1, A)),                 # asset layer 2
            full2d((E * A, 2 * latent_dim)),                  # merged heads W
            full2d((1, 2 * latent_dim)),                      # merged heads b
            full2d((1, 2 * latent_dim)),                      # alpha_pv row
        ],
        out_specs=pl.BlockSpec((TB, 2 * latent_dim), lambda i: (i, 0)),
        scratch_shapes=[
            pltpu.VMEM((TB * E, A), jnp.float32),             # asset pre-activation
            pltpu.VMEM((TB, E * A), jnp.float32),             # flattened trunk
        ],
        compiler_params=pltpu.CompilerParams(
            dimension_semantics=("parallel",),                # v7x: 2 TCs usable
            vmem_limit_bytes=_vmem_limit_bytes(TB, F, A, E, latent_dim)),
        cost_estimate=pl.CostEstimate(
            flops=int(flops), transcendentals=int(transcendentals),
            bytes_accessed=int(bytes_accessed)),
    )(alphas, x,
      params["w1"], params["b1"], params["w2"], params["b2"],
      params["w3"], params["b3"], params["w4"], params["b4"],
      wh, bh, alpha_pv)

    return heads[:, :latent_dim], heads[:, latent_dim:]


# ---------------------------------------------------------------------------
# Deterministic parameter init (matches the shapes from MlpExtractor.__init__)
# ---------------------------------------------------------------------------
def init_params(key, feat_dim, num_assets, embed_dim=32, latent_dim=64):
    ks = jax.random.split(key, 6)

    def lin(k, fan_in, fan_out):
        kw, kb = jax.random.split(k)
        bound = 1.0 / math.sqrt(fan_in)
        w = jax.random.uniform(kw, (fan_in, fan_out), jnp.float32, -bound, bound)
        b = jax.random.uniform(kb, (1, fan_out), jnp.float32, -bound, bound)
        return w, b

    w1, b1 = lin(ks[0], feat_dim, 256)                        # feat_extractor[0]
    w2, b2 = lin(ks[1], 256, embed_dim)                       # feat_extractor[2]
    w3, b3 = lin(ks[2], num_assets, 128)                      # asset_extractor[0]
    w4, b4 = lin(ks[3], 128, num_assets)                      # asset_extractor[2]
    wp, bp = lin(ks[4], num_assets * embed_dim, latent_dim)   # policy_net[0]
    wv, bv = lin(ks[5], num_assets * embed_dim, latent_dim)   # value_net[0]
    # 4 ScaledTanh alphas (feat, asset, policy, value), each init to 1.0
    alphas = jnp.ones((4,), jnp.float32)

    return dict(w1=w1, b1=b1, w2=w2, b2=b2, w3=w3, b3=b3, w4=w4, b4=b4,
                wp=wp, bp=bp, wv=wv, bv=bv, alphas=alphas)


# ---------------------------------------------------------------------------
# Pure-JAX reference (for correctness check)
# ---------------------------------------------------------------------------
def reference_forward(x, p):
    xt = jnp.swapaxes(x, -1, -2)                                   # (B, A, F)
    h1 = jax.nn.relu(xt @ p["w1"] + p["b1"])
    e = jnp.tanh((h1 @ p["w2"] + p["b2"]) * p["alphas"][0]) * SQRT2
    et = jnp.swapaxes(e, -1, -2)                                   # (B, 32, A)
    h2 = jax.nn.relu(et @ p["w3"] + p["b3"])
    a = jnp.tanh((h2 @ p["w4"] + p["b4"]) * p["alphas"][1]) * SQRT2
    flat = a.reshape(a.shape[0], -1)
    pi = jnp.tanh((flat @ p["wp"] + p["bp"]) * p["alphas"][2]) * SQRT2
    vf = jnp.tanh((flat @ p["wv"] + p["bv"]) * p["alphas"][3]) * SQRT2
    return pi, vf


if __name__ == "__main__":
    B, FEAT_DIM, NUM_ASSETS = 2, 16, 8

    key = jax.random.PRNGKey(0)
    k_x, k_p = jax.random.split(key)
    x = jax.random.normal(k_x, (B, FEAT_DIM, NUM_ASSETS), dtype=jnp.float32)
    params = init_params(k_p, FEAT_DIM, NUM_ASSETS)

    pi, vf = mlp_extractor_forward(x, params)
    pi, vf = jax.block_until_ready((pi, vf))

    pi_ref, vf_ref = reference_forward(x, params)
    assert pi.shape == (B, 64) and vf.shape == (B, 64)
    assert jnp.allclose(pi, pi_ref, atol=1e-4, rtol=1e-4)
    assert jnp.allclose(vf, vf_ref, atol=1e-4, rtol=1e-4)

    print("KERNEL_OK")
</pallas_src>

<mosaic_0001>
module attributes {stable_mosaic.version = 11 : i64} {
  func.func @_fused_kernel(%arg0: i32, %arg1: memref<4xf32, #tpu.memory_space<smem>>, %arg2: memref<2x16x8xf32, #tpu.memory_space<vmem>>, %arg3: memref<16x256xf32, #tpu.memory_space<vmem>>, %arg4: memref<1x256xf32, #tpu.memory_space<vmem>>, %arg5: memref<256x32xf32, #tpu.memory_space<vmem>>, %arg6: memref<1x32xf32, #tpu.memory_space<vmem>>, %arg7: memref<8x128xf32, #tpu.memory_space<vmem>>, %arg8: memref<1x128xf32, #tpu.memory_space<vmem>>, %arg9: memref<128x8xf32, #tpu.memory_space<vmem>>, %arg10: memref<1x8xf32, #tpu.memory_space<vmem>>, %arg11: memref<256x128xf32, #tpu.memory_space<vmem>>, %arg12: memref<1x128xf32, #tpu.memory_space<vmem>>, %arg13: memref<1x128xf32, #tpu.memory_space<vmem>>, %arg14: memref<2x128xf32, #tpu.memory_space<vmem>>, %arg15: memref<64x8xf32, #tpu.memory_space<vmem>>, %arg16: memref<2x256xf32, #tpu.memory_space<vmem>>) attributes {dimension_semantics = [#tpu.dimension_semantics<parallel>], iteration_bounds = array<i64: 1>, scalar_prefetch = 0 : i64, scratch_operands = 2 : i64, tpu.core_type = #tpu.core_type<tc>, window_params = [{transform_indices = @transform_0, window_bounds = array<i64: 4>}, {transform_indices = @transform_1, window_bounds = array<i64: 2, 16, 8>}, {pipeline_mode = #tpu.pipeline_mode<synchronous>, transform_indices = @transform_2, window_bounds = array<i64: 16, 256>}, {pipeline_mode = #tpu.pipeline_mode<synchronous>, transform_indices = @transform_3, window_bounds = array<i64: 1, 256>}, {pipeline_mode = #tpu.pipeline_mode<synchronous>, transform_indices = @transform_4, window_bounds = array<i64: 256, 32>}, {pipeline_mode = #tpu.pipeline_mode<synchronous>, transform_indices = @transform_5, window_bounds = array<i64: 1, 32>}, {pipeline_mode = #tpu.pipeline_mode<synchronous>, transform_indices = @transform_6, window_bounds = array<i64: 8, 128>}, {pipeline_mode = #tpu.pipeline_mode<synchronous>, transform_indices = @transform_7, window_bounds = array<i64: 1, 128>}, {pipeline_mode = #tpu.pipeline_mode<synchronous>, transform_indices = @transform_8, window_bounds = array<i64: 128, 8>}, {pipeline_mode = #tpu.pipeline_mode<synchronous>, transform_indices = @transform_9, window_bounds = array<i64: 1, 8>}, {pipeline_mode = #tpu.pipeline_mode<synchronous>, transform_indices = @transform_10, window_bounds = array<i64: 256, 128>}, {pipeline_mode = #tpu.pipeline_mode<synchronous>, transform_indices = @transform_11, window_bounds = array<i64: 1, 128>}, {pipeline_mode = #tpu.pipeline_mode<synchronous>, transform_indices = @transform_12, window_bounds = array<i64: 1, 128>}, {transform_indices = @transform_13, window_bounds = array<i64: 2, 128>}]} {
    %c0 = arith.constant 0 : index
    %c0_0 = arith.constant 0 : index
    %c0_1 = arith.constant 0 : index
    %0 = vector.load %arg2[%c0, %c0_0, %c0_1] : memref<2x16x8xf32, #tpu.memory_space<vmem>>, vector<1x16x8xf32>
    %1 = vector.shape_cast %0 : vector<1x16x8xf32> to vector<16x8xf32>
    %2 = tpu.transpose %1, [1, 0] : vector<16x8xf32> -> vector<8x16xf32>
    %c1 = arith.constant 1 : index
    %c0_2 = arith.constant 0 : index
    %c0_3 = arith.constant 0 : index
    %3 = vector.load %arg2[%c1, %c0_2, %c0_3] : memref<2x16x8xf32, #tpu.memory_space<vmem>>, vector<1x16x8xf32>
    %4 = vector.shape_cast %3 : vector<1x16x8xf32> to vector<16x8xf32>
    %5 = tpu.transpose %4, [1, 0] : vector<16x8xf32> -> vector<8x16xf32>
    %6 = tpu.concatenate %2, %5 in 0 : vector<8x16xf32>, vector<8x16xf32> -> vector<16x16xf32>
    %c0_4 = arith.constant 0 : index
    %c0_5 = arith.constant 0 : index
    %7 = vector.load %arg3[%c0_4, %c0_5] : memref<16x256xf32, #tpu.memory_space<vmem>>, vector<16x256xf32>
    %cst = arith.constant dense<0.000000e+00> : vector<16x256xf32>
    %8 = tpu.matmul %6, %7, %cst {dimension_numbers = #tpu.dot_dimension_numbers<[1], [0], [0], [1], [0, 0, 1, 1], [], []>} : vector<16x16xf32>, vector<16x256xf32>, vector<16x256xf32> -> vector<16x256xf32>
    %c0_6 = arith.constant 0 : index
    %c0_7 = arith.constant 0 : index
    %9 = vector.load %arg4[%c0_6, %c0_7] : memref<1x256xf32, #tpu.memory_space<vmem>>, vector<1x256xf32>
    %10 = vector.broadcast %9 : vector<1x256xf32> to vector<16x256xf32>
    %11 = arith.addf %8, %10 : vector<16x256xf32>
    %cst_8 = arith.constant 0.000000e+00 : f32
    %12 = vector.broadcast %cst_8 : f32 to vector<16x256xf32>
    %13 = arith.maximumf %11, %12 : vector<16x256xf32>
    %c0_9 = arith.constant 0 : index
    %c0_10 = arith.constant 0 : index
    %14 = vector.load %arg5[%c0_9, %c0_10] : memref<256x32xf32, #tpu.memory_space<vmem>>, vector<256x32xf32>
    %cst_11 = arith.constant dense<0.000000e+00> : vector<16x32xf32>
    %15 = tpu.matmul %13, %14, %cst_11 {dimension_numbers = #tpu.dot_dimension_numbers<[1], [0], [0], [1], [0, 0, 1, 1], [], []>} : vector<16x256xf32>, vector<256x32xf32>, vector<16x32xf32> -> vector<16x32xf32>
    %c0_12 = arith.constant 0 : index
    %c0_13 = arith.constant 0 : index
    %16 = vector.load %arg6[%c0_12, %c0_13] : memref<1x32xf32, #tpu.memory_space<vmem>>, vector<1x32xf32>
    %17 = vector.broadcast %16 : vector<1x32xf32> to vector<16x32xf32>
    %18 = arith.addf %15, %17 : vector<16x32xf32>
    %c0_14 = arith.constant 0 : index
    %19 = memref.load %arg1[%c0_14] : memref<4xf32, #tpu.memory_space<smem>>
    %20 = vector.broadcast %19 : f32 to vector<16x32xf32>
    %21 = arith.mulf %18, %20 : vector<16x32xf32>
    %22 = math.tanh %21 : vector<16x32xf32>
    %cst_15 = arith.constant 1.41421354 : f32
    %23 = vector.broadcast %cst_15 : f32 to vector<16x32xf32>
    %24 = arith.mulf %22, %23 : vector<16x32xf32>
    %25 = vector.extract_strided_slice %24 {offsets = [0, 0], sizes = [8, 32], strides = [1, 1]} : vector<16x32xf32> to vector<8x32xf32>
    %26 = tpu.transpose %25, [1, 0] : vector<8x32xf32> -> vector<32x8xf32>
    %27 = vector.extract_strided_slice %24 {offsets = [8, 0], sizes = [8, 32], strides = [1, 1]} : vector<16x32xf32> to vector<8x32xf32>
    %28 = tpu.transpose %27, [1, 0] : vector<8x32xf32> -> vector<32x8xf32>
    %29 = tpu.concatenate %26, %28 in 0 : vector<32x8xf32>, vector<32x8xf32> -> vector<64x8xf32>
    %c0_16 = arith.constant 0 : index
    %c0_17 = arith.constant 0 : index
    %30 = vector.load %arg7[%c0_16, %c0_17] : memref<8x128xf32, #tpu.memory_space<vmem>>, vector<8x128xf32>
    %cst_18 = arith.constant dense<0.000000e+00> : vector<64x128xf32>
    %31 = tpu.matmul %29, %30, %cst_18 {dimension_numbers = #tpu.dot_dimension_numbers<[1], [0], [0], [1], [0, 0, 1, 1], [], []>} : vector<64x8xf32>, vector<8x128xf32>, vector<64x128xf32> -> vector<64x128xf32>
    %c0_19 = arith.constant 0 : index
    %c0_20 = arith.constant 0 : index
    %32 = vector.load %arg8[%c0_19, %c0_20] : memref<1x128xf32, #tpu.memory_space<vmem>>, vector<1x128xf32>
    %33 = vector.broadcast %32 : vector<1x128xf32> to vector<64x128xf32>
    %34 = arith.addf %31, %33 : vector<64x128xf32>
    %cst_21 = arith.constant 0.000000e+00 : f32
    %35 = vector.broadcast %cst_21 : f32 to vector<64x128xf32>
    %36 = arith.maximumf %34, %35 : vector<64x128xf32>
    %c0_22 = arith.constant 0 : index
    %c0_23 = arith.constant 0 : index
    %37 = vector.load %arg9[%c0_22, %c0_23] : memref<128x8xf32, #tpu.memory_space<vmem>>, vector<128x8xf32>
    %cst_24 = arith.constant dense<0.000000e+00> : vector<64x8xf32>
    %38 = tpu.matmul %36, %37, %cst_24 {dimension_numbers = #tpu.dot_dimension_numbers<[1], [0], [0], [1], [0, 0, 1, 1], [], []>} : vector<64x128xf32>, vector<128x8xf32>, vector<64x8xf32> -> vector<64x8xf32>
    %c0_25 = arith.constant 0 : index
    %c0_26 = arith.constant 0 : index
    %39 = vector.load %arg10[%c0_25, %c0_26] : memref<1x8xf32, #tpu.memory_space<vmem>>, vector<1x8xf32>
    %40 = vector.broadcast %39 : vector<1x8xf32> to vector<64x8xf32>
    %41 = arith.addf %38, %40 : vector<64x8xf32>
    %c0_27 = arith.constant 0 : index
    %c0_28 = arith.constant 0 : index
    %42 = vector.load %arg15[%c0_27, %c0_28] : memref<64x8xf32, #tpu.memory_space<vmem>>, vector<64x8xf32>
    tpu.vector_store %arg15[%c0_27, %c0_28], %41 {strides = array<i32>} : memref<64x8xf32, #tpu.memory_space<vmem>>, vector<64x8xf32>,
    %c0_29 = arith.constant 0 : index
    %c0_30 = arith.constant 0 : index
    %43 = tpu.strided_load %arg15[%c0_29, %c0_30] {strides = array<i32: 32, 1>} : memref<64x8xf32, #tpu.memory_space<vmem>>, vector<2x8xf32>
    %c0_31 = arith.constant 0 : index
    %c0_32 = arith.constant 0 : index
    %44 = vector.load %arg16[%c0_31, %c0_32] : memref<2x256xf32, #tpu.memory_space<vmem>>, vector<2x8xf32>
    tpu.vector_store %arg16[%c0_31, %c0_32], %43 {strides = array<i32>} : memref<2x256xf32, #tpu.memory_space<vmem>>, vector<2x8xf32>,
    %c1_33 = arith.constant 1 : index
    %c0_34 = arith.constant 0 : index
    %45 = tpu.strided_load %arg15[%c1_33, %c0_34] {strides = array<i32: 32, 1>} : memref<64x8xf32, #tpu.memory_space<vmem>>, vector<2x8xf32>
    %c0_35 = arith.constant 0 : index
    %c8 = arith.constant 8 : index
    %46 = vector.load %arg16[%c0_35, %c8] : memref<2x256xf32, #tpu.memory_space<vmem>>, vector<2x8xf32>
    tpu.vector_store %arg16[%c0_35, %c8], %45 {strides = array<i32>} : memref<2x256xf32, #tpu.memory_space<vmem>>, vector<2x8xf32>,
    %c2 = arith.constant 2 : index
    %c0_36 = arith.constant 0 : index
    %47 = tpu.strided_load %arg15[%c2, %c0_36] {strides = array<i32: 32, 1>} : memref<64x8xf32, #tpu.memory_space<vmem>>, vector<2x8xf32>
    %c0_37 = arith.constant 0 : index
    %c16 = arith.constant 16 : index
    %48 = vector.load %arg16[%c0_37, %c16] : memref<2x256xf32, #tpu.memory_space<vmem>>, vector<2x8xf32>
    tpu.vector_store %arg16[%c0_37, %c16], %47 {strides = array<i32>} : memref<2x256xf32, #tpu.memory_space<vmem>>, vector<2x8xf32>,
    %c3 = arith.constant 3 : index
    %c0_38 = arith.constant 0 : index
    %49 = tpu.strided_load %arg15[%c3, %c0_38] {strides = array<i32: 32, 1>} : memref<64x8xf32, #tpu.memory_space<vmem>>, vector<2x8xf32>
    %c0_39 = arith.constant 0 : index
    %c24 = arith.constant 24 : index
    %50 = vector.load %arg16[%c0_39, %c24] : memref<2x256xf32, #tpu.memory_space<vmem>>, vector<2x8xf32>
    tpu.vector_store %arg16[%c0_39, %c24], %49 {strides = array<i32>} : memref<2x256xf32, #tpu.memory_space<vmem>>, vector<2x8xf32>,
    %c4 = arith.constant 4 : index
    %c0_40 = arith.constant 0 : index
    %51 = tpu.strided_load %arg15[%c4, %c0_40] {strides = array<i32: 32, 1>} : memref<64x8xf32, #tpu.memory_space<vmem>>, vector<2x8xf32>
    %c0_41 = arith.constant 0 : index
    %c32 = arith.constant 32 : index
    %52 = vector.load %arg16[%c0_41, %c32] : memref<2x256xf32, #tpu.memory_space<vmem>>, vector<2x8xf32>
    tpu.vector_store %arg16[%c0_41, %c32], %51 {strides = array<i32>} : memref<2x256xf32, #tpu.memory_space<vmem>>, vector<2x8xf32>,
    %c5 = arith.constant 5 : index
    %c0_42 = arith.constant 0 : index
    %53 = tpu.strided_load %arg15[%c5, %c0_42] {strides = array<i32: 32, 1>} : memref<64x8xf32, #tpu.memory_space<vmem>>, vector<2x8xf32>
    %c0_43 = arith.constant 0 : index
    %c40 = arith.constant 40 : index
    %54 = vector.load %arg16[%c0_43, %c40] : memref<2x256xf32, #tpu.memory_space<vmem>>, vector<2x8xf32>
    tpu.vector_store %arg16[%c0_43, %c40], %53 {strides = array<i32>} : memref<2x256xf32, #tpu.memory_space<vmem>>, vector<2x8xf32>,
    %c6 = arith.constant 6 : index
    %c0_44 = arith.constant 0 : index
    %55 = tpu.strided_load %arg15[%c6, %c0_44] {strides = array<i32: 32, 1>} : memref<64x8xf32, #tpu.memory_space<vmem>>, vector<2x8xf32>
    %c0_45 = arith.constant 0 : index
    %c48 = arith.constant 48 : index
    %56 = vector.load %arg16[%c0_45, %c48] : memref<2x256xf32, #tpu.memory_space<vmem>>, vector<2x8xf32>
    tpu.vector_store %arg16[%c0_45, %c48], %55 {strides = array<i32>} : memref<2x256xf32, #tpu.memory_space<vmem>>, vector<2x8xf32>,
    %c7 = arith.constant 7 : index
    %c0_46 = arith.constant 0 : index
    %57 = tpu.strided_load %arg15[%c7, %c0_46] {strides = array<i32: 32, 1>} : memref<64x8xf32, #tpu.memory_space<vmem>>, vector<2x8xf32>
    %c0_47 = arith.constant 0 : index
    %c56 = arith.constant 56 : index
    %58 = vector.load %arg16[%c0_47, %c56] : memref<2x256xf32, #tpu.memory_space<vmem>>, vector<2x8xf32>
    tpu.vector_store %arg16[%c0_47, %c56], %57 {strides = array<i32>} : memref<2x256xf32, #tpu.memory_space<vmem>>, vector<2x8xf32>,
    %c8_48 = arith.constant 8 : index
    %c0_49 = arith.constant 0 : index
    %59 = tpu.strided_load %arg15[%c8_48, %c0_49] {strides = array<i32: 32, 1>} : memref<64x8xf32, #tpu.memory_space<vmem>>, vector<2x8xf32>
    %c0_50 = arith.constant 0 : index
    %c64 = arith.constant 64 : index
    %60 = vector.load %arg16[%c0_50, %c64] : memref<2x256xf32, #tpu.memory_space<vmem>>, vector<2x8xf32>
    tpu.vector_store %arg16[%c0_50, %c64], %59 {strides = array<i32>} : memref<2x256xf32, #tpu.memory_space<vmem>>, vector<2x8xf32>,
    %c9 = arith.constant 9 : index
    %c0_51 = arith.constant 0 : index
    %61 = tpu.strided_load %arg15[%c9, %c0_51] {strides = array<i32: 32, 1>} : memref<64x8xf32, #tpu.memory_space<vmem>>, vector<2x8xf32>
    %c0_52 = arith.constant 0 : index
    %c72 = arith.constant 72 : index
    %62 = vector.load %arg16[%c0_52, %c72] : memref<2x256xf32, #tpu.memory_space<vmem>>, vector<2x8xf32>
    tpu.vector_store %arg16[%c0_52, %c72], %61 {strides = array<i32>} : memref<2x256xf32, #tpu.memory_space<vmem>>, vector<2x8xf32>,
    %c10 = arith.constant 10 : index
    %c0_53 = arith.constant 0 : index
    %63 = tpu.strided_load %arg15[%c10, %c0_53] {strides = array<i32: 32, 1>} : memref<64x8xf32, #tpu.memory_space<vmem>>, vector<2x8xf32>
    %c0_54 = arith.constant 0 : index
    %c80 = arith.constant 80 : index
    %64 = vector.load %arg16[%c0_54, %c80] : memref<2x256xf32, #tpu.memory_space<vmem>>, vector<2x8xf32>
    tpu.vector_store %arg16[%c0_54, %c80], %63 {strides = array<i32>} : memref<2x256xf32, #tpu.memory_space<vmem>>, vector<2x8xf32>,
    %c11 = arith.constant 11 : index
    %c0_55 = arith.constant 0 : index
    %65 = tpu.strided_load %arg15[%c11, %c0_55] {strides = array<i32: 32, 1>} : memref<64x8xf32, #tpu.memory_space<vmem>>, vector<2x8xf32>
    %c0_56 = arith.constant 0 : index
    %c88 = arith.constant 88 : index
    %66 = vector.load %arg16[%c0_56, %c88] : memref<2x256xf32, #tpu.memory_space<vmem>>, vector<2x8xf32>
    tpu.vector_store %arg16[%c0_56, %c88], %65 {strides = array<i32>} : memref<2x256xf32, #tpu.memory_space<vmem>>, vector<2x8xf32>,
    %c12 = arith.constant 12 : index
    %c0_57 = arith.constant 0 : index
    %67 = tpu.strided_load %arg15[%c12, %c0_57] {strides = array<i32: 32, 1>} : memref<64x8xf32, #tpu.memory_space<vmem>>, vector<2x8xf32>
    %c0_58 = arith.constant 0 : index
    %c96 = arith.constant 96 : index
    %68 = vector.load %arg16[%c0_58, %c96] : memref<2x256xf32, #tpu.memory_space<vmem>>, vector<2x8xf32>
    tpu.vector_store %arg16[%c0_58, %c96], %67 {strides = array<i32>} : memref<2x256xf32, #tpu.memory_space<vmem>>, vector<2x8xf32>,
    %c13 = arith.constant 13 : index
    %c0_59 = arith.constant 0 : index
    %69 = tpu.strided_load %arg15[%c13, %c0_59] {strides = array<i32: 32, 1>} : memref<64x8xf32, #tpu.memory_space<vmem>>, vector<2x8xf32>
    %c0_60 = arith.constant 0 : index
    %c104 = arith.constant 104 : index
    %70 = vector.load %arg16[%c0_60, %c104] : memref<2x256xf32, #tpu.memory_space<vmem>>, vector<2x8xf32>
    tpu.vector_store %arg16[%c0_60, %c104], %69 {strides = array<i32>} : memref<2x256xf32, #tpu.memory_space<vmem>>, vector<2x8xf32>,
    %c14 = arith.constant 14 : index
    %c0_61 = arith.constant 0 : index
    %71 = tpu.strided_load %arg15[%c14, %c0_61] {strides = array<i32: 32, 1>} : memref<64x8xf32, #tpu.memory_space<vmem>>, vector<2x8xf32>
    %c0_62 = arith.constant 0 : index
    %c112 = arith.constant 112 : index
    %72 = vector.load %arg16[%c0_62, %c112] : memref<2x256xf32, #tpu.memory_space<vmem>>, vector<2x8xf32>
    tpu.vector_store %arg16[%c0_62, %c112], %71 {strides = array<i32>} : memref<2x256xf32, #tpu.memory_space<vmem>>, vector<2x8xf32>,
    %c15 = arith.constant 15 : index
    %c0_63 = arith.constant 0 : index
    %73 = tpu.strided_load %arg15[%c15, %c0_63] {strides = array<i32: 32, 1>} : memref<64x8xf32, #tpu.memory_space<vmem>>, vector<2x8xf32>
    %c0_64 = arith.constant 0 : index
    %c120 = arith.constant 120 : index
    %74 = vector.load %arg16[%c0_64, %c120] : memref<2x256xf32, #tpu.memory_space<vmem>>, vector<2x8xf32>
    tpu.vector_store %arg16[%c0_64, %c120], %73 {strides = array<i32>} : memref<2x256xf32, #tpu.memory_space<vmem>>, vector<2x8xf32>,
    %c16_65 = arith.constant 16 : index
    %c0_66 = arith.constant 0 : index
    %75 = tpu.strided_load %arg15[%c16_65, %c0_66] {strides = array<i32: 32, 1>} : memref<64x8xf32, #tpu.memory_space<vmem>>, vector<2x8xf32>
    %c0_67 = arith.constant 0 : index
    %c128 = arith.constant 128 : index
    %76 = vector.load %arg16[%c0_67, %c128] : memref<2x256xf32, #tpu.memory_space<vmem>>, vector<2x8xf32>
    tpu.vector_store %arg16[%c0_67, %c128], %75 {strides = array<i32>} : memref<2x256xf32, #tpu.memory_space<vmem>>, vector<2x8xf32>,
    %c17 = arith.constant 17 : index
    %c0_68 = arith.constant 0 : index
    %77 = tpu.strided_load %arg15[%c17, %c0_68] {strides = array<i32: 32, 1>} : memref<64x8xf32, #tpu.memory_space<vmem>>, vector<2x8xf32>
    %c0_69 = arith.constant 0 : index
    %c136 = arith.constant 136 : index
    %78 = vector.load %arg16[%c0_69, %c136] : memref<2x256xf32, #tpu.memory_space<vmem>>, vector<2x8xf32>
    tpu.vector_store %arg16[%c0_69, %c136], %77 {strides = array<i32>} : memref<2x256xf32, #tpu.memory_space<vmem>>, vector<2x8xf32>,
    %c18 = arith.constant 18 : index
    %c0_70 = arith.constant 0 : index
    %79 = tpu.strided_load %arg15[%c18, %c0_70] {strides = array<i32: 32, 1>} : memref<64x8xf32, #tpu.memory_space<vmem>>, vector<2x8xf32>
    %c0_71 = arith.constant 0 : index
    %c144 = arith.constant 144 : index
    %80 = vector.load %arg16[%c0_71, %c144] : memref<2x256xf32, #tpu.memory_space<vmem>>, vector<2x8xf32>
    tpu.vector_store %arg16[%c0_71, %c144], %79 {strides = array<i32>} : memref<2x256xf32, #tpu.memory_space<vmem>>, vector<2x8xf32>,
    %c19 = arith.constant 19 : index
    %c0_72 = arith.constant 0 : index
    %81 = tpu.strided_load %arg15[%c19, %c0_72] {strides = array<i32: 32, 1>} : memref<64x8xf32, #tpu.memory_space<vmem>>, vector<2x8xf32>
    %c0_73 = arith.constant 0 : index
    %c152 = arith.constant 152 : index
    %82 = vector.load %arg16[%c0_73, %c152] : memref<2x256xf32, #tpu.memory_space<vmem>>, vector<2x8xf32>
    tpu.vector_store %arg16[%c0_73, %c152], %81 {strides = array<i32>} : memref<2x256xf32, #tpu.memory_space<vmem>>, vector<2x8xf32>,
    %c20 = arith.constant 20 : index
    %c0_74 = arith.constant 0 : index
    %83 = tpu.strided_load %arg15[%c20, %c0_74] {strides = array<i32: 32, 1>} : memref<64x8xf32, #tpu.memory_space<vmem>>, vector<2x8xf32>
    %c0_75 = arith.constant 0 : index
    %c160 = arith.constant 160 : index
    %84 = vector.load %arg16[%c0_75, %c160] : memref<2x256xf32, #tpu.memory_space<vmem>>, vector<2x8xf32>
    tpu.vector_store %arg16[%c0_75, %c160], %83 {strides = array<i32>} : memref<2x256xf32, #tpu.memory_space<vmem>>, vector<2x8xf32>,
    %c21 = arith.constant 21 : index
    %c0_76 = arith.constant 0 : index
    %85 = tpu.strided_load %arg15[%c21, %c0_76] {strides = array<i32: 32, 1>} : memref<64x8xf32, #tpu.memory_space<vmem>>, vector<2x8xf32>
    %c0_77 = arith.constant 0 : index
    %c168 = arith.constant 168 : index
    %86 = vector.load %arg16[%c0_77, %c168] : memref<2x256xf32, #tpu.memory_space<vmem>>, vector<2x8xf32>
    tpu.vector_store %arg16[%c0_77, %c168], %85 {strides = array<i32>} : memref<2x256xf32, #tpu.memory_space<vmem>>, vector<2x8xf32>,
    %c22 = arith.constant 22 : index
    %c0_78 = arith.constant 0 : index
    %87 = tpu.strided_load %arg15[%c22, %c0_78] {strides = array<i32: 32, 1>} : memref<64x8xf32, #tpu.memory_space<vmem>>, vector<2x8xf32>
    %c0_79 = arith.constant 0 : index
    %c176 = arith.constant 176 : index
    %88 = vector.load %arg16[%c0_79, %c176] : memref<2x256xf32, #tpu.memory_space<vmem>>, vector<2x8xf32>
    tpu.vector_store %arg16[%c0_79, %c176], %87 {strides = array<i32>} : memref<2x256xf32, #tpu.memory_space<vmem>>, vector<2x8xf32>,
    %c23 = arith.constant 23 : index
    %c0_80 = arith.constant 0 : index
    %89 = tpu.strided_load %arg15[%c23, %c0_80] {strides = array<i32: 32, 1>} : memref<64x8xf32, #tpu.memory_space<vmem>>, vector<2x8xf32>
    %c0_81 = arith.constant 0 : index
    %c184 = arith.constant 184 : index
    %90 = vector.load %arg16[%c0_81, %c184] : memref<2x256xf32, #tpu.memory_space<vmem>>, vector<2x8xf32>
    tpu.vector_store %arg16[%c0_81, %c184], %89 {strides = array<i32>} : memref<2x256xf32, #tpu.memory_space<vmem>>, vector<2x8xf32>,
    %c24_82 = arith.constant 24 : index
    %c0_83 = arith.constant 0 : index
    %91 = tpu.strided_load %arg15[%c24_82, %c0_83] {strides = array<i32: 32, 1>} : memref<64x8xf32, #tpu.memory_space<vmem>>, vector<2x8xf32>
    %c0_84 = arith.constant 0 : index
    %c192 = arith.constant 192 : index
    %92 = vector.load %arg16[%c0_84, %c192] : memref<2x256xf32, #tpu.memory_space<vmem>>, vector<2x8xf32>
    tpu.vector_store %arg16[%c0_84, %c192], %91 {strides = array<i32>} : memref<2x256xf32, #tpu.memory_space<vmem>>, vector<2x8xf32>,
    %c25 = arith.constant 25 : index
    %c0_85 = arith.constant 0 : index
    %93 = tpu.strided_load %arg15[%c25, %c0_85] {strides = array<i32: 32, 1>} : memref<64x8xf32, #tpu.memory_space<vmem>>, vector<2x8xf32>
    %c0_86 = arith.constant 0 : index
    %c200 = arith.constant 200 : index
    %94 = vector.load %arg16[%c0_86, %c200] : memref<2x256xf32, #tpu.memory_space<vmem>>, vector<2x8xf32>
    tpu.vector_store %arg16[%c0_86, %c200], %93 {strides = array<i32>} : memref<2x256xf32, #tpu.memory_space<vmem>>, vector<2x8xf32>,
    %c26 = arith.constant 26 : index
    %c0_87 = arith.constant 0 : index
    %95 = tpu.strided_load %arg15[%c26, %c0_87] {strides = array<i32: 32, 1>} : memref<64x8xf32, #tpu.memory_space<vmem>>, vector<2x8xf32>
    %c0_88 = arith.constant 0 : index
    %c208 = arith.constant 208 : index
    %96 = vector.load %arg16[%c0_88, %c208] : memref<2x256xf32, #tpu.memory_space<vmem>>, vector<2x8xf32>
    tpu.vector_store %arg16[%c0_88, %c208], %95 {strides = array<i32>} : memref<2x256xf32, #tpu.memory_space<vmem>>, vector<2x8xf32>,
    %c27 = arith.constant 27 : index
    %c0_89 = arith.constant 0 : index
    %97 = tpu.strided_load %arg15[%c27, %c0_89] {strides = array<i32: 32, 1>} : memref<64x8xf32, #tpu.memory_space<vmem>>, vector<2x8xf32>
    %c0_90 = arith.constant 0 : index
    %c216 = arith.constant 216 : index
    %98 = vector.load %arg16[%c0_90, %c216] : memref<2x256xf32, #tpu.memory_space<vmem>>, vector<2x8xf32>
    tpu.vector_store %arg16[%c0_90, %c216], %97 {strides = array<i32>} : memref<2x256xf32, #tpu.memory_space<vmem>>, vector<2x8xf32>,
    %c28 = arith.constant 28 : index
    %c0_91 = arith.constant 0 : index
    %99 = tpu.strided_load %arg15[%c28, %c0_91] {strides = array<i32: 32, 1>} : memref<64x8xf32, #tpu.memory_space<vmem>>, vector<2x8xf32>
    %c0_92 = arith.constant 0 : index
    %c224 = arith.constant 224 : index
    %100 = vector.load %arg16[%c0_92, %c224] : memref<2x256xf32, #tpu.memory_space<vmem>>, vector<2x8xf32>
    tpu.vector_store %arg16[%c0_92, %c224], %99 {strides = array<i32>} : memref<2x256xf32, #tpu.memory_space<vmem>>, vector<2x8xf32>,
    %c29 = arith.constant 29 : index
    %c0_93 = arith.constant 0 : index
    %101 = tpu.strided_load %arg15[%c29, %c0_93] {strides = array<i32: 32, 1>} : memref<64x8xf32, #tpu.memory_space<vmem>>, vector<2x8xf32>
    %c0_94 = arith.constant 0 : index
    %c232 = arith.constant 232 : index
    %102 = vector.load %arg16[%c0_94, %c232] : memref<2x256xf32, #tpu.memory_space<vmem>>, vector<2x8xf32>
    tpu.vector_store %arg16[%c0_94, %c232], %101 {strides = array<i32>} : memref<2x256xf32, #tpu.memory_space<vmem>>, vector<2x8xf32>,
    %c30 = arith.constant 30 : index
    %c0_95 = arith.constant 0 : index
    %103 = tpu.strided_load %arg15[%c30, %c0_95] {strides = array<i32: 32, 1>} : memref<64x8xf32, #tpu.memory_space<vmem>>, vector<2x8xf32>
    %c0_96 = arith.constant 0 : index
    %c240 = arith.constant 240 : index
    %104 = vector.load %arg16[%c0_96, %c240] : memref<2x256xf32, #tpu.memory_space<vmem>>, vector<2x8xf32>
    tpu.vector_store %arg16[%c0_96, %c240], %103 {strides = array<i32>} : memref<2x256xf32, #tpu.memory_space<vmem>>, vector<2x8xf32>,
    %c31 = arith.constant 31 : index
    %c0_97 = arith.constant 0 : index
    %105 = tpu.strided_load %arg15[%c31, %c0_97] {strides = array<i32: 32, 1>} : memref<64x8xf32, #tpu.memory_space<vmem>>, vector<2x8xf32>
    %c0_98 = arith.constant 0 : index
    %c248 = arith.constant 248 : index
    %106 = vector.load %arg16[%c0_98, %c248] : memref<2x256xf32, #tpu.memory_space<vmem>>, vector<2x8xf32>
    tpu.vector_store %arg16[%c0_98, %c248], %105 {strides = array<i32>} : memref<2x256xf32, #tpu.memory_space<vmem>>, vector<2x8xf32>,
    %c0_99 = arith.constant 0 : index
    %c0_100 = arith.constant 0 : index
    %107 = vector.load %arg16[%c0_99, %c0_100] : memref<2x256xf32, #tpu.memory_space<vmem>>, vector<2x256xf32>
    %c1_101 = arith.constant 1 : index
    %108 = memref.load %arg1[%c1_101] : memref<4xf32, #tpu.memory_space<smem>>
    %109 = vector.broadcast %108 : f32 to vector<2x256xf32>
    %110 = arith.mulf %107, %109 : vector<2x256xf32>
    %111 = math.tanh %110 : vector<2x256xf32>
    %cst_102 = arith.constant 1.41421354 : f32
    %112 = vector.broadcast %cst_102 : f32 to vector<2x256xf32>
    %113 = arith.mulf %111, %112 : vector<2x256xf32>
    %c0_103 = arith.constant 0 : index
    %c0_104 = arith.constant 0 : index
    %114 = vector.load %arg11[%c0_103, %c0_104] : memref<256x128xf32, #tpu.memory_space<vmem>>, vector<256x128xf32>
    %cst_105 = arith.constant dense<0.000000e+00> : vector<2x128xf32>
    %115 = tpu.matmul %113, %114, %cst_105 {dimension_numbers = #tpu.dot_dimension_numbers<[1], [0], [0], [1], [0, 0, 1, 1], [], []>} : vector<2x256xf32>, vector<256x128xf32>, vector<2x128xf32> -> vector<2x128xf32>
    %c0_106 = arith.constant 0 : index
    %c0_107 = arith.constant 0 : index
    %116 = vector.load %arg12[%c0_106, %c0_107] : memref<1x128xf32, #tpu.memory_space<vmem>>, vector<1x128xf32>
    %117 = vector.broadcast %116 : vector<1x128xf32> to vector<2x128xf32>
    %118 = arith.addf %115, %117 : vector<2x128xf32>
    %c0_108 = arith.constant 0 : index
    %c0_109 = arith.constant 0 : index
    %119 = vector.load %arg13[%c0_108, %c0_109] : memref<1x128xf32, #tpu.memory_space<vmem>>, vector<1x128xf32>
    %120 = vector.broadcast %119 : vector<1x128xf32> to vector<2x128xf32>
    %121 = arith.mulf %118, %120 : vector<2x128xf32>
    %122 = math.tanh %121 : vector<2x128xf32>
    %cst_110 = arith.constant 1.41421354 : f32
    %123 = vector.broadcast %cst_110 : f32 to vector<2x128xf32>
    %124 = arith.mulf %122, %123 : vector<2x128xf32>
    %c0_111 = arith.constant 0 : index
    %c0_112 = arith.constant 0 : index
    %125 = vector.load %arg14[%c0_111, %c0_112] : memref<2x128xf32, #tpu.memory_space<vmem>>, vector<2x128xf32>
    tpu.vector_store %arg14[%c0_111, %c0_112], %124 {strides = array<i32>} : memref<2x128xf32, #tpu.memory_space<vmem>>, vector<2x128xf32>,
    return
  }
  func.func @transform_0(%arg0: i32) -> i32 {
    %c0_i32 = arith.constant 0 : i32
    %c0_i32_0 = arith.constant 0 : i32
    return %c0_i32 : i32
  }
  func.func @transform_1(%arg0: i32) -> (i32, i32, i32) {
    %c0_i32 = arith.constant 0 : i32
    %c0_i32_0 = arith.constant 0 : i32
    %c0_i32_1 = arith.constant 0 : i32
    return %arg0, %c0_i32, %c0_i32_0 : i32, i32, i32
  }
  func.func @transform_2(%arg0: i32) -> (i32, i32) {
    %c0_i32 = arith.constant 0 : i32
    %c0_i32_0 = arith.constant 0 : i32
    %c0_i32_1 = arith.constant 0 : i32
    return %c0_i32, %c0_i32_0 : i32, i32
  }
  func.func @transform_3(%arg0: i32) -> (i32, i32) {
    %c0_i32 = arith.constant 0 : i32
    %c0_i32_0 = arith.constant 0 : i32
    %c0_i32_1 = arith.constant 0 : i32
    return %c0_i32, %c0_i32_0 : i32, i32
  }
  func.func @transform_4(%arg0: i32) -> (i32, i32) {
    %c0_i32 = arith.constant 0 : i32
    %c0_i32_0 = arith.constant 0 : i32
    %c0_i32_1 = arith.constant 0 : i32
    return %c0_i32, %c0_i32_0 : i32, i32
  }
  func.func @transform_5(%arg0: i32) -> (i32, i32) {
    %c0_i32 = arith.constant 0 : i32
    %c0_i32_0 = arith.constant 0 : i32
    %c0_i32_1 = arith.constant 0 : i32
    return %c0_i32, %c0_i32_0 : i32, i32
  }
  func.func @transform_6(%arg0: i32) -> (i32, i32) {
    %c0_i32 = arith.constant 0 : i32
    %c0_i32_0 = arith.constant 0 : i32
    %c0_i32_1 = arith.constant 0 : i32
    return %c0_i32, %c0_i32_0 : i32, i32
  }
  func.func @transform_7(%arg0: i32) -> (i32, i32) {
    %c0_i32 = arith.constant 0 : i32
    %c0_i32_0 = arith.constant 0 : i32
    %c0_i32_1 = arith.constant 0 : i32
    return %c0_i32, %c0_i32_0 : i32, i32
  }
  func.func @transform_8(%arg0: i32) -> (i32, i32) {
    %c0_i32 = arith.constant 0 : i32
    %c0_i32_0 = arith.constant 0 : i32
    %c0_i32_1 = arith.constant 0 : i32
    return %c0_i32, %c0_i32_0 : i32, i32
  }
  func.func @transform_9(%arg0: i32) -> (i32, i32) {
    %c0_i32 = arith.constant 0 : i32
    %c0_i32_0 = arith.constant 0 : i32
    %c0_i32_1 = arith.constant 0 : i32
    return %c0_i32, %c0_i32_0 : i32, i32
  }
  func.func @transform_10(%arg0: i32) -> (i32, i32) {
    %c0_i32 = arith.constant 0 : i32
    %c0_i32_0 = arith.constant 0 : i32
    %c0_i32_1 = arith.constant 0 : i32
    return %c0_i32, %c0_i32_0 : i32, i32
  }
  func.func @transform_11(%arg0: i32) -> (i32, i32) {
    %c0_i32 = arith.constant 0 : i32
    %c0_i32_0 = arith.constant 0 : i32
    %c0_i32_1 = arith.constant 0 : i32
    return %c0_i32, %c0_i32_0 : i32, i32
  }
  func.func @transform_12(%arg0: i32) -> (i32, i32) {
    %c0_i32 = arith.constant 0 : i32
    %c0_i32_0 = arith.constant 0 : i32
    %c0_i32_1 = arith.constant 0 : i32
    return %c0_i32, %c0_i32_0 : i32, i32
  }
  func.func @transform_13(%arg0: i32) -> (i32, i32) {
    %c0_i32 = arith.constant 0 : i32
    %c0_i32_0 = arith.constant 0 : i32
    return %arg0, %c0_i32 : i32, i32
  }
}

</mosaic_0001>

<llo_original>
// kernel: tpu_custom_call.1
$region0: #{tpu_custom_call.1}
  #allocation0 [shape = 'u32[]', space=smem, size = 0x4, offset = 0x4, fixed_abs, tag = 'smem constant byte address 0x4 - core index']
  #allocation1 [shape = 'u32[144,128]{1,0:T(1,128)}', space=vmem, size = 0x12000, scoped, tag = 'internal scratch']
  #allocation2 [shape = 'f32[64,8]{1,0:T(8,128)}', space=vmem, size = 0x8000, scoped, tag = 'scratch operand']
  #allocation3 [shape = 'f32[2,256]{1,0:T(2,128)}', space=vmem, size = 0x800, scoped, tag = 'scratch operand']
  %s0 = inlined_call_operand.vmem [shape: f32[4], index: 0, kind: input, shape index: {}]
  %s1 = inlined_call_operand.vmem [shape: f32[2,16,8], index: 1, kind: input, shape index: {}]
  %s2 = inlined_call_operand.vmem [shape: f32[16,256], index: 2, kind: input, shape index: {}]
  %s3 = inlined_call_operand.vmem [shape: f32[1,256], index: 3, kind: input, shape index: {}]
  %s4 = inlined_call_operand.vmem [shape: f32[256,32], index: 4, kind: input, shape index: {}]
  %s5 = inlined_call_operand.vmem [shape: f32[1,32], index: 5, kind: input, shape index: {}]
  %s6 = inlined_call_operand.vmem [shape: f32[8,128], index: 6, kind: input, shape index: {}]
  %s7 = inlined_call_operand.vmem [shape: f32[1,128], index: 7, kind: input, shape index: {}]
  %s8 = inlined_call_operand.vmem [shape: f32[128,8], index: 8, kind: input, shape index: {}]
  %s9 = inlined_call_operand.vmem [shape: f32[1,8], index: 9, kind: input, shape index: {}]
  %s10 = inlined_call_operand.vmem [shape: f32[256,128], index: 10, kind: input, shape index: {}]
  %s11 = inlined_call_operand.vmem [shape: f32[1,128], index: 11, kind: input, shape index: {}]
  %s12 = inlined_call_operand.vmem [shape: f32[1,128], index: 12, kind: input, shape index: {}]
  %s13 = inlined_call_operand.hbm [shape: f32[2,128], index: 13, kind: output, shape index: {}]
  %s14 = sld [smem:[#allocation0]]
  $region66: #{tpu_custom_call.1} parent=0
    _
  %s16 = ssub.s32 1, %s14
  %s17 = scalar_select 0, %s16, %s14
  $region1: #{tpu_custom_call.1} parent=0
    #allocation4 [shape = 'u8[512]{0}', space=smem, size = 0x200, scoped, tag = 'input window, operand 0, single buffered']
    #allocation5 [shape = 's32[1]{0}', space=sflag, size = 0x4, scoped, tag = 'scoped memory for tpu_custom_call.1']
    #allocation6 [shape = 's32[1]{0}', space=sflag, size = 0x4, scoped, tag = 'scoped memory for tpu_custom_call.1']
    #allocation7 [shape = 'u8[1024]{0}', space=vmem, size = 0x400, scoped, tag = 'output window, operand 0, single buffered']
    %18 = vsyncpa [#allocation6], 0
    %19 = vsyncpa [#allocation5], 0
    // Predicated region
    $region2: #{tpu_custom_call.1} parent=1 // pred_check
      _
    $region3: #{tpu_custom_call.1} parent=1 // pred_check_branch
      %21 = sbr.rel (0) target = $region5
    $region4: #{tpu_custom_call.1} parent=1 // pred_region
      %s23 = ssub.s32 16, 16
      %24 = vsyncadd [#allocation6], %s23
      %s26 = sshll.u32 %s0, 4
      %s27 = int_to_ptr.vmem [resolvable:$true] %s26
      %29 = dma.vmem_to_smem %s27, 16, [#allocation4], [#allocation6]
    $region5: #{tpu_custom_call.1} parent=1 // pred_fallthru
      _
    // Predicated region
    $region6: #{tpu_custom_call.1} parent=1 // pred_check
      _
    $region7: #{tpu_custom_call.1} parent=1 // pred_check_branch
      %31 = sbr.rel (0) target = $region9
    $region8: #{tpu_custom_call.1} parent=1 // pred_region
      _
    $region9: #{tpu_custom_call.1} parent=1 // pred_fallthru
      _
    // Predicated region
    $region10: #{tpu_custom_call.1} parent=1 // pred_check
      _
    $region11: #{tpu_custom_call.1} parent=1 // pred_check_branch
      %33 = sbr.rel (0) target = $region13
    $region12: #{tpu_custom_call.1} parent=1 // pred_region
      _
    $region13: #{tpu_custom_call.1} parent=1 // pred_fallthru
      _
    // Predicated region
    $region14: #{tpu_custom_call.1} parent=1 // pred_check
      _
    $region15: #{tpu_custom_call.1} parent=1 // pred_check_branch
      %35 = sbr.rel (0) target = $region17
    $region16: #{tpu_custom_call.1} parent=1 // pred_region
      _
    $region17: #{tpu_custom_call.1} parent=1 // pred_fallthru
      _
    // Predicated region
    $region18: #{tpu_custom_call.1} parent=1 // pred_check
      _
    $region19: #{tpu_custom_call.1} parent=1 // pred_check_branch
      %37 = sbr.rel (0) target = $region21
    $region20: #{tpu_custom_call.1} parent=1 // pred_region
      _
    $region21: #{tpu_custom_call.1} parent=1 // pred_fallthru
      _
    // Predicated region
    $region22: #{tpu_custom_call.1} parent=1 // pred_check
      _
    $region23: #{tpu_custom_call.1} parent=1 // pred_check_branch
      %39 = sbr.rel (0) target = $region25
    $region24: #{tpu_custom_call.1} parent=1 // pred_region
      _
    $region25: #{tpu_custom_call.1} parent=1 // pred_fallthru
      _
    // Predicated region
    $region26: #{tpu_custom_call.1} parent=1 // pred_check
      _
    $region27: #{tpu_custom_call.1} parent=1 // pred_check_branch
      %41 = sbr.rel (0) target = $region29
    $region28: #{tpu_custom_call.1} parent=1 // pred_region
      _
    $region29: #{tpu_custom_call.1} parent=1 // pred_fallthru
      _
    // Predicated region
    $region30: #{tpu_custom_call.1} parent=1 // pred_check
      _
    $region31: #{tpu_custom_call.1} parent=1 // pred_check_branch
      %43 = sbr.rel (0) target = $region33
    $region32: #{tpu_custom_call.1} parent=1 // pred_region
      _
    $region33: #{tpu_custom_call.1} parent=1 // pred_fallthru
      _
    // Predicated region
    $region34: #{tpu_custom_call.1} parent=1 // pred_check
      _
    $region35: #{tpu_custom_call.1} parent=1 // pred_check_branch
      %45 = sbr.rel (0) target = $region37
    $region36: #{tpu_custom_call.1} parent=1 // pred_region
      _
    $region37: #{tpu_custom_call.1} parent=1 // pred_fallthru
      _
    // Predicated region
    $region38: #{tpu_custom_call.1} parent=1 // pred_check
      _
    $region39: #{tpu_custom_call.1} parent=1 // pred_check_branch
      %47 = sbr.rel (0) target = $region41
    $region40: #{tpu_custom_call.1} parent=1 // pred_region
      _
    $region41: #{tpu_custom_call.1} parent=1 // pred_fallthru
      _
    // Predicated region
    $region42: #{tpu_custom_call.1} parent=1 // pred_check
      _
    $region43: #{tpu_custom_call.1} parent=1 // pred_check_branch
      %49 = sbr.rel (0) target = $region45
    $region44: #{tpu_custom_call.1} parent=1 // pred_region
      _
    $region45: #{tpu_custom_call.1} parent=1 // pred_fallthru
      _
    // Predicated region
    $region46: #{tpu_custom_call.1} parent=1 // pred_check
      _
    $region47: #{tpu_custom_call.1} parent=1 // pred_check_branch
      %51 = sbr.rel (0) target = $region49
    $region48: #{tpu_custom_call.1} parent=1 // pred_region
      _
    $region49: #{tpu_custom_call.1} parent=1 // pred_fallthru
      _
    // Predicated region
    $region50: #{tpu_custom_call.1} parent=1 // pred_check
      _
    $region51: #{tpu_custom_call.1} parent=1 // pred_check_branch
      %53 = sbr.rel (0) target = $region53
    $region52: #{tpu_custom_call.1} parent=1 // pred_region
      _
    $region53: #{tpu_custom_call.1} parent=1 // pred_fallthru
      _
    // Predicated region
    $region54: #{tpu_custom_call.1} parent=1 // pred_check
      _
    $region55: #{tpu_custom_call.1} parent=1 // pred_check_branch
      %55 = sbr.rel (0) target = $region57
    $region56: #{tpu_custom_call.1} parent=1 // pred_region
      %56 = dma.done [#allocation6], 16
    $region57: #{tpu_custom_call.1} parent=1 // pred_fallthru
      _
    %57 = sfence
    %v58 = vld [vmem:[%s1] sm:$0xff]
    %v59 = vld [vmem:[%s1 + $0x8] sm:$0xff]
    %60 = vxpose.xlu0.b32.start [1/16] %v58, 128
    %61 = vxpose.xlu0.b32.cont [2/16] %v59, 128
    %62 = vxpose.xlu0.b32.cont [3/16] 0.0, 128
    %63 = vxpose.xlu0.b32.cont [4/16] 0.0, 128
    %64 = vxpose.xlu0.b32.cont [5/16] 0.0, 128
    %65 = vxpose.xlu0.b32.cont [6/16] 0.0, 128
    %66 = vxpose.xlu0.b32.cont [7/16] 0.0, 128
    %67 = vxpose.xlu0.b32.cont [8/16] 0.0, 128
    %68 = vxpose.xlu0.b32.cont [9/16] 0.0, 128
    %69 = vxpose.xlu0.b32.cont [10/16] 0.0, 128
    %70 = vxpose.xlu0.b32.cont [11/16] 0.0, 128
    %71 = vxpose.xlu0.b32.cont [12/16] 0.0, 128
    %72 = vxpose.xlu0.b32.cont [13/16] 0.0, 128
    %73 = vxpose.xlu0.b32.cont [14/16] 0.0, 128
    %74 = vxpose.xlu0.b32.cont [15/16] 0.0, 128
    %75 = vxpose.xlu0.b32.end [16/16] 0.0, 128
    %v76 = vpop.trf.xlu0
    %v77 = vpop.trf.xlu0
    %v78 = vpop.trf.xlu0
    %v79 = vpop.trf.xlu0
    %v80 = vpop.trf.xlu0
    %v81 = vpop.trf.xlu0
    %v82 = vpop.trf.xlu0
    %v83 = vpop.trf.xlu0
    %v84 = vpop.trf.xlu0
    %v85 = vpop.trf.xlu0
    %v86 = vpop.trf.xlu0
    %v87 = vpop.trf.xlu0
    %v88 = vpop.trf.xlu0
    %v89 = vpop.trf.xlu0
    %v90 = vpop.trf.xlu0
    %v91 = vpop.trf.xlu0
    %s92 = scalar_lea.vmem %s1, 16
    %v93 = vld [vmem:[%s92] sm:$0xff]
    %v94 = vld [vmem:[%s92 + $0x8] sm:$0xff]
    %95 = vxpose.xlu0.b32.start [1/16] %v93, 128
    %96 = vxpose.xlu0.b32.cont [2/16] %v94, 128
    %97 = vxpose.xlu0.b32.cont [3/16] 0.0, 128
    %98 = vxpose.xlu0.b32.cont [4/16] 0.0, 128
    %99 = vxpose.xlu0.b32.cont [5/16] 0.0, 128
    %100 = vxpose.xlu0.b32.cont [6/16] 0.0, 128
    %101 = vxpose.xlu0.b32.cont [7/16] 0.0, 128
    %102 = vxpose.xlu0.b32.cont [8/16] 0.0, 128
    %103 = vxpose.xlu0.b32.cont [9/16] 0.0, 128
    %104 = vxpose.xlu0.b32.cont [10/16] 0.0, 128
    %105 = vxpose.xlu0.b32.cont [11/16] 0.0, 128
    %106 = vxpose.xlu0.b32.cont [12/16] 0.0, 128
    %107 = vxpose.xlu0.b32.cont [13/16] 0.0, 128
    %108 = vxpose.xlu0.b32.cont [14/16] 0.0, 128
    %109 = vxpose.xlu0.b32.cont [15/16] 0.0, 128
    %110 = vxpose.xlu0.b32.end [16/16] 0.0, 128
    %v111 = vpop.trf.xlu0
    %v112 = vpop.trf.xlu0
    %v113 = vpop.trf.xlu0
    %v114 = vpop.trf.xlu0
    %v115 = vpop.trf.xlu0
    %v116 = vpop.trf.xlu0
    %v117 = vpop.trf.xlu0
    %v118 = vpop.trf.xlu0
    %v119 = vpop.trf.xlu0
    %v120 = vpop.trf.xlu0
    %v121 = vpop.trf.xlu0
    %v122 = vpop.trf.xlu0
    %v123 = vpop.trf.xlu0
    %v124 = vpop.trf.xlu0
    %v125 = vpop.trf.xlu0
    %v126 = vpop.trf.xlu0
    %v127 = vld [vmem:[%s2] sm:$0xff]
    %v128 = vld [vmem:[%s2 + $0x8] sm:$0xff]
    %v129 = vld [vmem:[%s2 + $0x10] sm:$0xff]
    %v130 = vld [vmem:[%s2 + $0x18] sm:$0xff]
    %v131 = vld [vmem:[%s3] sm:$0x3]
    %v133 = vlaneseq
    %v134 = vshrl.u32 %v133, 7
    %v135 = vsub.s32 0, %v134
    %v136 = vrot.slane %v131, %v135
    %v137 = vlaneseq
    %v138 = vshrl.u32 %v137, 7
    %v139 = vsub.s32 1, %v138
    %v140 = vrot.slane %v131, %v139
    %vm143 = vcmask 130048
    %v145 = vsel %vm143, %v76, 0
    %v148 = vsel %vm143, %v111, 0
    %150 = vmatprep.subr.mxu0 0.0
    %151 = vmatpush1.msra.mxu0 0.0
    %152 = vmatprep.subr.mxu0 0.0
    %153 = vmatpush1.msra.mxu0 0.0
    %154 = vmatprep.subr.mxu0 0.0
    %155 = vmatpush1.msra.mxu0 0.0
    %156 = vmatprep.subr.mxu0 0.0
    %157 = vmatpush1.msra.mxu0 0.0
    %158 = vmatprep.subr.mxu0 0.0
    %159 = vmatpush1.msra.mxu0 0.0
    %160 = vmatprep.subr.mxu0 0.0
    %161 = vmatpush1.msra.mxu0 0.0
    %162 = vmatprep.subr.mxu0 0.0
    %163 = vmatpush1.msra.mxu0 0.0
    %164 = vmatprep.subr.mxu0 0.0
    %165 = vmatpush1.msra.mxu0 0.0
    %166 = vmatprep.subr.mxu0 0.0
    %167 = vmatpush1.msra.mxu0 0.0
    %168 = vmatprep.subr.mxu0 0.0
    %169 = vmatpush1.msra.mxu0 0.0
    %170 = vmatprep.subr.mxu0 0.0
    %171 = vmatpush1.msra.mxu0 0.0
    %172 = vmatprep.subr.mxu0 0.0
    %173 = vmatpush1.msra.mxu0 0.0
    %174 = vmatprep.subr.mxu0 0.0
    %175 = vmatpush1.msra.mxu0 0.0
    %176 = vmatprep.subr.mxu0 0.0
    %177 = vmatpush1.msra.mxu0 0.0
    %178 = vmatprep.subr.mxu0 %v130
    %179 = vmatpush1.msra.mxu0 %v129
    %180 = vmatprep.subr.mxu0 %v128
    %181 = vmatpush1.msra.mxu0 %v127
    %182 = vmatprep.subr.mxu0 0.0
    %183 = vmatpush2.msra.mxu0 0.0
    %184 = vmatprep.subr.mxu0 0.0
    %185 = vmatpush2.msra.mxu0 0.0
    %186 = vmatprep.subr.mxu0 0.0
    %187 = vmatpush2.msra.mxu0 0.0
    %188 = vmatprep.subr.mxu0 0.0
    %189 = vmatpush2.msra.mxu0 0.0
    %190 = vmatprep.subr.mxu0 0.0
    %191 = vmatpush2.msra.mxu0 0.0
    %192 = vmatprep.subr.mxu0 0.0
    %193 = vmatpush2.msra.mxu0 0.0
    %194 = vmatprep.subr.mxu0 0.0
    %195 = vmatpush2.msra.mxu0 0.0
    %196 = vmatprep.subr.mxu0 0.0
    %197 = vmatpush2.msra.mxu0 0.0
    %198 = vmatprep.subr.mxu0 0.0
    %199 = vmatpush2.msra.mxu0 0.0
    %200 = vmatprep.subr.mxu0 0.0
    %201 = vmatpush2.msra.mxu0 0.0
    %202 = vmatprep.subr.mxu0 0.0
    %203 = vmatpush2.msra.mxu0 0.0
    %204 = vmatprep.subr.mxu0 0.0
    %205 = vmatpush2.msra.mxu0 0.0
    %206 = vmatprep.subr.mxu0 0.0
    %207 = vmatpush2.msra.mxu0 0.0
    %208 = vmatprep.subr.mxu0 0.0
    %209 = vmatpush2.msra.mxu0 0.0
    %210 = vmatprep.subr.mxu0 0.0
    %211 = vmatpush2.msra.mxu0 0.0
    %212 = vmatprep.subr.mxu0 0.0
    %213 = vmatpush2.msra.mxu0 0.0
    %214 = vmatprep.mubr.f32.mxu0 0.0
    %215 = vmatmul.mubr.f32.gmra.mxu0 %v145
    %v216 = vpop.f32.mrf.mxu0
    %v217 = vadd.f32 %v136, %v216
    %v218 = vpop.f32.mrf.mxu0
    %v219 = vadd.f32 %v140, %v218
    %220 = vmatprep.mubr.f32.mxu0 0.0
    %221 = vmatmul.mubr.f32.gmra.mxu0 %v148
    %v222 = vpop.f32.mrf.mxu0
    %v223 = vadd.f32 %v136, %v222
    %v224 = vpop.f32.mrf.mxu0
    %v225 = vadd.f32 %v140, %v224
    %226 = vdwg.mxu0
    %v227 = vmax.f32 %v217, 0.0
    %v228 = vmax.f32 %v219, 0.0
    %v229 = vmax.f32 %v223, 0.0
    %v230 = vmax.f32 %v225, 0.0
    %v231 = vld [vmem:[%s4] sm:$0xff]
    %v232 = vld [vmem:[%s4 + $0x8] sm:$0xff]
    %v233 = vld [vmem:[%s4 + $0x10] sm:$0xff]
    %v234 = vld [vmem:[%s4 + $0x18] sm:$0xff]
    %v235 = vld [vmem:[%s4 + $0x20] sm:$0xff]
    %v236 = vld [vmem:[%s4 + $0x28] sm:$0xff]
    %v237 = vld [vmem:[%s4 + $0x30] sm:$0xff]
    %v238 = vld [vmem:[%s4 + $0x38] sm:$0xff]
    %v239 = vld [vmem:[%s4 + $0x40] sm:$0xff]
    %v240 = vld [vmem:[%s4 + $0x48] sm:$0xff]
    %v241 = vld [vmem:[%s4 + $0x50] sm:$0xff]
    %v242 = vld [vmem:[%s4 + $0x58] sm:$0xff]
    %v243 = vld [vmem:[%s4 + $0x60] sm:$0xff]
    %v244 = vld [vmem:[%s4 + $0x68] sm:$0xff]
    %v245 = vld [vmem:[%s4 + $0x70] sm:$0xff]
    %v246 = vld [vmem:[%s4 + $0x78] sm:$0xff]
    %v247 = vld [vmem:[%s4 + $0x80] sm:$0xff]
    %v248 = vld [vmem:[%s4 + $0x88] sm:$0xff]
    %v249 = vld [vmem:[%s4 + $0x90] sm:$0xff]
    %v250 = vld [vmem:[%s4 + $0x98] sm:$0xff]
    %v251 = vld [vmem:[%s4 + $0xa0] sm:$0xff]
    %v252 = vld [vmem:[%s4 + $0xa8] sm:$0xff]
    %v253 = vld [vmem:[%s4 + $0xb0] sm:$0xff]
    %v254 = vld [vmem:[%s4 + $0xb8] sm:$0xff]
    %v255 = vld [vmem:[%s4 + $0xc0] sm:$0xff]
    %v256 = vld [vmem:[%s4 + $0xc8] sm:$0xff]
    %v257 = vld [vmem:[%s4 + $0xd0] sm:$0xff]
    %v258 = vld [vmem:[%s4 + $0xd8] sm:$0xff]
    %v259 = vld [vmem:[%s4 + $0xe0] sm:$0xff]
    %v260 = vld [vmem:[%s4 + $0xe8] sm:$0xff]
    %v261 = vld [vmem:[%s4 + $0xf0] sm:$0xff]
    %v262 = vld [vmem:[%s4 + $0xf8] sm:$0xff]
    %v263 = vld [vmem:[%s5] sm:$0x1]
    %v265 = vlaneseq
    %v266 = vshrl.u32 %v265, 7
    %v267 = vsub.s32 0, %v266
    %v268 = vrot.slane %v263, %v267
    %270 = vmatprep.subr.mxu0 0.0
    %271 = vmatpush1.msra.mxu0 %v246
    %272 = vmatprep.subr.mxu0 0.0
    %273 = vmatpush1.msra.mxu0 %v245
    %274 = vmatprep.subr.mxu0 0.0
    %275 = vmatpush1.msra.mxu0 %v244
    %276 = vmatprep.subr.mxu0 0.0
    %277 = vmatpush1.msra.mxu0 %v243
    %278 = vmatprep.subr.mxu0 0.0
    %279 = vmatpush1.msra.mxu0 %v242
    %280 = vmatprep.subr.mxu0 0.0
    %281 = vmatpush1.msra.mxu0 %v241
    %282 = vmatprep.subr.mxu0 0.0
    %283 = vmatpush1.msra.mxu0 %v240
    %284 = vmatprep.subr.mxu0 0.0
    %285 = vmatpush1.msra.mxu0 %v239
    %286 = vmatprep.subr.mxu0 0.0
    %287 = vmatpush1.msra.mxu0 %v238
    %288 = vmatprep.subr.mxu0 0.0
    %289 = vmatpush1.msra.mxu0 %v237
    %290 = vmatprep.subr.mxu0 0.0
    %291 = vmatpush1.msra.mxu0 %v236
    %292 = vmatprep.subr.mxu0 0.0
    %293 = vmatpush1.msra.mxu0 %v235
    %294 = vmatprep.subr.mxu0 0.0
    %295 = vmatpush1.msra.mxu0 %v234
    %296 = vmatprep.subr.mxu0 0.0
    %297 = vmatpush1.msra.mxu0 %v233
    %298 = vmatprep.subr.mxu0 0.0
    %299 = vmatpush1.msra.mxu0 %v232
    %300 = vmatprep.subr.mxu0 0.0
    %301 = vmatpush1.msra.mxu0 %v231
    %302 = vmatprep.subr.mxu0 0.0
    %303 = vmatpush2.msra.mxu0 %v262
    %304 = vmatprep.subr.mxu0 0.0
    %305 = vmatpush2.msra.mxu0 %v261
    %306 = vmatprep.subr.mxu0 0.0
    %307 = vmatpush2.msra.mxu0 %v260
    %308 = vmatprep.subr.mxu0 0.0
    %309 = vmatpush2.msra.mxu0 %v259
    %310 = vmatprep.subr.mxu0 0.0
    %311 = vmatpush2.msra.mxu0 %v258
    %312 = vmatprep.subr.mxu0 0.0
    %313 = vmatpush2.msra.mxu0 %v257
    %314 = vmatprep.subr.mxu0 0.0
    %315 = vmatpush2.msra.mxu0 %v256
    %316 = vmatprep.subr.mxu0 0.0
    %317 = vmatpush2.msra.mxu0 %v255
    %318 = vmatprep.subr.mxu0 0.0
    %319 = vmatpush2.msra.mxu0 %v254
    %320 = vmatprep.subr.mxu0 0.0
    %321 = vmatpush2.msra.mxu0 %v253
    %322 = vmatprep.subr.mxu0 0.0
    %323 = vmatpush2.msra.mxu0 %v252
    %324 = vmatprep.subr.mxu0 0.0
    %325 = vmatpush2.msra.mxu0 %v251
    %326 = vmatprep.subr.mxu0 0.0
    %327 = vmatpush2.msra.mxu0 %v250
    %328 = vmatprep.subr.mxu0 0.0
    %329 = vmatpush2.msra.mxu0 %v249
    %330 = vmatprep.subr.mxu0 0.0
    %331 = vmatpush2.msra.mxu0 %v248
    %332 = vmatprep.subr.mxu0 0.0
    %333 = vmatpush2.msra.mxu0 %v247
    %334 = vmatprep.mubr.f32.mxu0 %v228
    %335 = vmatmul.mubr.f32.gmra.mxu0 %v227
    %v336 = vpop.f32.mrf.mxu0
    %v337 = vadd.f32 %v268, %v336
    %v338 = vpop.f32.mrf.mxu0
    %339 = vmatprep.mubr.f32.mxu0 %v230
    %340 = vmatmul.mubr.f32.gmra.mxu0 %v229
    %v341 = vpop.f32.mrf.mxu0
    %v342 = vadd.f32 %v268, %v341
    %v343 = vpop.f32.mrf.mxu0
    %344 = vdwg.mxu0
    %s345 = sld [smem:[#allocation4]]
    %v346 = vstv %s345
    %v347 = vmul.f32 %v337, %v346
    %v348 = vmul.f32 %v342, %v346
    %v349 = vtanh.pop %v347
    %v350 = vtanh.pop %v348
    %v351 = vmul.f32 %v349, 1.4142135
    %v352 = vmul.f32 %v350, 1.4142135
    %353 = vxpose.xlu0.b32.start [1/16] %v351, 128
    %354 = vxpose.xlu0.b32.cont [2/16] 0.0, 128
    %355 = vxpose.xlu0.b32.cont [3/16] 0.0, 128
    %356 = vxpose.xlu0.b32.cont [4/16] 0.0, 128
    %357 = vxpose.xlu0.b32.cont [5/16] 0.0, 128
    %358 = vxpose.xlu0.b32.cont [6/16] 0.0, 128
    %359 = vxpose.xlu0.b32.cont [7/16] 0.0, 128
    %360 = vxpose.xlu0.b32.cont [8/16] 0.0, 128
    %361 = vxpose.xlu0.b32.cont [9/16] 0.0, 128
    %362 = vxpose.xlu0.b32.cont [10/16] 0.0, 128
    %363 = vxpose.xlu0.b32.cont [11/16] 0.0, 128
    %364 = vxpose.xlu0.b32.cont [12/16] 0.0, 128
    %365 = vxpose.xlu0.b32.cont [13/16] 0.0, 128
    %366 = vxpose.xlu0.b32.cont [14/16] 0.0, 128
    %367 = vxpose.xlu0.b32.cont [15/16] 0.0, 128
    %368 = vxpose.xlu0.b32.end [16/16] 0.0, 128
    %v369 = vpop.trf.xlu0
    %v370 = vpop.trf.xlu0
    %v371 = vpop.trf.xlu0
    %v372 = vpop.trf.xlu0
    %v373 = vpop.trf.xlu0
    %v374 = vpop.trf.xlu0
    %v375 = vpop.trf.xlu0
    %v376 = vpop.trf.xlu0
    %v377 = vpop.trf.xlu0
    %v378 = vpop.trf.xlu0
    %v379 = vpop.trf.xlu0
    %v380 = vpop.trf.xlu0
    %v381 = vpop.trf.xlu0
    %v382 = vpop.trf.xlu0
    %v383 = vpop.trf.xlu0
    %v384 = vpop.trf.xlu0
    %385 = vxpose.xlu0.b32.start [1/16] %v352, 128
    %386 = vxpose.xlu0.b32.cont [2/16] 0.0, 128
    %387 = vxpose.xlu0.b32.cont [3/16] 0.0, 128
    %388 = vxpose.xlu0.b32.cont [4/16] 0.0, 128
    %389 = vxpose.xlu0.b32.cont [5/16] 0.0, 128
    %390 = vxpose.xlu0.b32.cont [6/16] 0.0, 128
    %391 = vxpose.xlu0.b32.cont [7/16] 0.0, 128
    %392 = vxpose.xlu0.b32.cont [8/16] 0.0, 128
    %393 = vxpose.xlu0.b32.cont [9/16] 0.0, 128
    %394 = vxpose.xlu0.b32.cont [10/16] 0.0, 128
    %395 = vxpose.xlu0.b32.cont [11/16] 0.0, 128
    %396 = vxpose.xlu0.b32.cont [12/16] 0.0, 128
    %397 = vxpose.xlu0.b32.cont [13/16] 0.0, 128
    %398 = vxpose.xlu0.b32.cont [14/16] 0.0, 128
    %399 = vxpose.xlu0.b32.cont [15/16] 0.0, 128
    %400 = vxpose.xlu0.b32.end [16/16] 0.0, 128
    %v401 = vpop.trf.xlu0
    %v402 = vpop.trf.xlu0
    %v403 = vpop.trf.xlu0
    %v404 = vpop.trf.xlu0
    %v405 = vpop.trf.xlu0
    %v406 = vpop.trf.xlu0
    %v407 = vpop.trf.xlu0
    %v408 = vpop.trf.xlu0
    %v409 = vpop.trf.xlu0
    %v410 = vpop.trf.xlu0
    %v411 = vpop.trf.xlu0
    %v412 = vpop.trf.xlu0
    %v413 = vpop.trf.xlu0
    %v414 = vpop.trf.xlu0
    %v415 = vpop.trf.xlu0
    %v416 = vpop.trf.xlu0
    %v417 = vld [vmem:[%s6] sm:$0xff]
    %v418 = vld [vmem:[%s7] sm:$0x1]
    %v420 = vlaneseq
    %v421 = vshrl.u32 %v420, 7
    %v422 = vsub.s32 0, %v421
    %v423 = vrot.slane %v418, %v422
    %vm425 = vcmask 64512
    %v427 = vsel %vm425, %v369, 0
    %v430 = vsel %vm425, %v370, 0
    %v433 = vsel %vm425, %v371, 0
    %v436 = vsel %vm425, %v372, 0
    %v439 = vsel %vm425, %v401, 0
    %v442 = vsel %vm425, %v402, 0
    %v445 = vsel %vm425, %v403, 0
    %v448 = vsel %vm425, %v404, 0
    %450 = vmatprep.subr.mxu0 0.0
    %451 = vmatpush1.msra.mxu0 0.0
    %452 = vmatprep.subr.mxu0 0.0
    %453 = vmatpush1.msra.mxu0 0.0
    %454 = vmatprep.subr.mxu0 0.0
    %455 = vmatpush1.msra.mxu0 0.0
    %456 = vmatprep.subr.mxu0 0.0
    %457 = vmatpush1.msra.mxu0 0.0
    %458 = vmatprep.subr.mxu0 0.0
    %459 = vmatpush1.msra.mxu0 0.0
    %460 = vmatprep.subr.mxu0 0.0
    %461 = vmatpush1.msra.mxu0 0.0
    %462 = vmatprep.subr.mxu0 0.0
    %463 = vmatpush1.msra.mxu0 0.0
    %464 = vmatprep.subr.mxu0 0.0
    %465 = vmatpush1.msra.mxu0 0.0
    %466 = vmatprep.subr.mxu0 0.0
    %467 = vmatpush1.msra.mxu0 0.0
    %468 = vmatprep.subr.mxu0 0.0
    %469 = vmatpush1.msra.mxu0 0.0
    %470 = vmatprep.subr.mxu0 0.0
    %471 = vmatpush1.msra.mxu0 0.0
    %472 = vmatprep.subr.mxu0 0.0
    %473 = vmatpush1.msra.mxu0 0.0
    %474 = vmatprep.subr.mxu0 0.0
    %475 = vmatpush1.msra.mxu0 0.0
    %476 = vmatprep.subr.mxu0 0.0
    %477 = vmatpush1.msra.mxu0 0.0
    %478 = vmatprep.subr.mxu0 0.0
    %479 = vmatpush1.msra.mxu0 0.0
    %480 = vmatprep.subr.mxu0 0.0
    %481 = vmatpush1.msra.mxu0 %v417
    %482 = vmatprep.subr.mxu0 0.0
    %483 = vmatpush2.msra.mxu0 0.0
    %484 = vmatprep.subr.mxu0 0.0
    %485 = vmatpush2.msra.mxu0 0.0
    %486 = vmatprep.subr.mxu0 0.0
    %487 = vmatpush2.msra.mxu0 0.0
    %488 = vmatprep.subr.mxu0 0.0
    %489 = vmatpush2.msra.mxu0 0.0
    %490 = vmatprep.subr.mxu0 0.0
    %491 = vmatpush2.msra.mxu0 0.0
    %492 = vmatprep.subr.mxu0 0.0
    %493 = vmatpush2.msra.mxu0 0.0
    %494 = vmatprep.subr.mxu0 0.0
    %495 = vmatpush2.msra.mxu0 0.0
    %496 = vmatprep.subr.mxu0 0.0
    %497 = vmatpush2.msra.mxu0 0.0
    %498 = vmatprep.subr.mxu0 0.0
    %499 = vmatpush2.msra.mxu0 0.0
    %500 = vmatprep.subr.mxu0 0.0
    %501 = vmatpush2.msra.mxu0 0.0
    %502 = vmatprep.subr.mxu0 0.0
    %503 = vmatpush2.msra.mxu0 0.0
    %504 = vmatprep.subr.mxu0 0.0
    %505 = vmatpush2.msra.mxu0 0.0
    %506 = vmatprep.subr.mxu0 0.0
    %507 = vmatpush2.msra.mxu0 0.0
    %508 = vmatprep.subr.mxu0 0.0
    %509 = vmatpush2.msra.mxu0 0.0
    %510 = vmatprep.subr.mxu0 0.0
    %511 = vmatpush2.msra.mxu0 0.0
    %512 = vmatprep.subr.mxu0 0.0
    %513 = vmatpush2.msra.mxu0 0.0
    %514 = vmatprep.mubr.f32.mxu0 0.0
    %515 = vmatmul.mubr.f32.gmra.mxu0 %v427
    %v516 = vpop.f32.mrf.mxu0
    %v517 = vadd.f32 %v423, %v516
    %v518 = vpop.f32.mrf.mxu0
    %519 = vmatprep.mubr.f32.mxu0 0.0
    %520 = vmatmul.mubr.f32.gmra.mxu0 %v430
    %v521 = vpop.f32.mrf.mxu0
    %v522 = vadd.f32 %v423, %v521
    %v523 = vpop.f32.mrf.mxu0
    %524 = vmatprep.mubr.f32.mxu0 0.0
    %525 = vmatmul.mubr.f32.gmra.mxu0 %v433
    %v526 = vpop.f32.mrf.mxu0
    %v527 = vadd.f32 %v423, %v526
    %v528 = vpop.f32.mrf.mxu0
    %529 = vmatprep.mubr.f32.mxu0 0.0
    %530 = vmatmul.mubr.f32.gmra.mxu0 %v436
    %v531 = vpop.f32.mrf.mxu0
    %v532 = vadd.f32 %v423, %v531
    %v533 = vpop.f32.mrf.mxu0
    %534 = vmatprep.mubr.f32.mxu0 0.0
    %535 = vmatmul.mubr.f32.gmra.mxu0 %v439
    %v536 = vpop.f32.mrf.mxu0
    %v537 = vadd.f32 %v423, %v536
    %v538 = vpop.f32.mrf.mxu0
    %539 = vmatprep.mubr.f32.mxu0 0.0
    %540 = vmatmul.mubr.f32.gmra.mxu0 %v442
    %v541 = vpop.f32.mrf.mxu0
    %v542 = vadd.f32 %v423, %v541
    %v543 = vpop.f32.mrf.mxu0
    %544 = vmatprep.mubr.f32.mxu0 0.0
    %545 = vmatmul.mubr.f32.gmra.mxu0 %v445
    %v546 = vpop.f32.mrf.mxu0
    %v547 = vadd.f32 %v423, %v546
    %v548 = vpop.f32.mrf.mxu0
    %549 = vmatprep.mubr.f32.mxu0 0.0
    %550 = vmatmul.mubr.f32.gmra.mxu0 %v448
    %v551 = vpop.f32.mrf.mxu0
    %v552 = vadd.f32 %v423, %v551
    %v553 = vpop.f32.mrf.mxu0
    %554 = vdwg.mxu0
    %v555 = vmax.f32 %v517, 0.0
    %v556 = vmax.f32 %v522, 0.0
    %v557 = vmax.f32 %v527, 0.0
    %v558 = vmax.f32 %v532, 0.0
    %v559 = vmax.f32 %v537, 0.0
    %v560 = vmax.f32 %v542, 0.0
    %v561 = vmax.f32 %v547, 0.0
    %v562 = vmax.f32 %v552, 0.0
    %v563 = vld [vmem:[%s8] sm:$0xff]
    %v564 = vld [vmem:[%s8 + $0x8] sm:$0xff]
    %v565 = vld [vmem:[%s8 + $0x10] sm:$0xff]
    %v566 = vld [vmem:[%s8 + $0x18] sm:$0xff]
    %v567 = vld [vmem:[%s8 + $0x20] sm:$0xff]
    %v568 = vld [vmem:[%s8 + $0x28] sm:$0xff]
    %v569 = vld [vmem:[%s8 + $0x30] sm:$0xff]
    %v570 = vld [vmem:[%s8 + $0x38] sm:$0xff]
    %v571 = vld [vmem:[%s8 + $0x40] sm:$0xff]
    %v572 = vld [vmem:[%s8 + $0x48] sm:$0xff]
    %v573 = vld [vmem:[%s8 + $0x50] sm:$0xff]
    %v574 = vld [vmem:[%s8 + $0x58] sm:$0xff]
    %v575 = vld [vmem:[%s8 + $0x60] sm:$0xff]
    %v576 = vld [vmem:[%s8 + $0x68] sm:$0xff]
    %v577 = vld [vmem:[%s8 + $0x70] sm:$0xff]
    %v578 = vld [vmem:[%s8 + $0x78] sm:$0xff]
    %v579 = vld [vmem:[%s9] sm:$0x1]
    %v581 = vlaneseq
    %v582 = vshrl.u32 %v581, 7
    %v583 = vsub.s32 0, %v582
    %v584 = vrot.slane %v579, %v583
    %586 = vmatprep.subr.mxu0 0.0
    %587 = vmatpush1.msra.mxu0 %v578
    %588 = vmatprep.subr.mxu0 0.0
    %589 = vmatpush1.msra.mxu0 %v577
    %590 = vmatprep.subr.mxu0 0.0
    %591 = vmatpush1.msra.mxu0 %v576
    %592 = vmatprep.subr.mxu0 0.0
    %593 = vmatpush1.msra.mxu0 %v575
    %594 = vmatprep.subr.mxu0 0.0
    %595 = vmatpush1.msra.mxu0 %v574
    %596 = vmatprep.subr.mxu0 0.0
    %597 = vmatpush1.msra.mxu0 %v573
    %598 = vmatprep.subr.mxu0 0.0
    %599 = vmatpush1.msra.mxu0 %v572
    %600 = vmatprep.subr.mxu0 0.0
    %601 = vmatpush1.msra.mxu0 %v571
    %602 = vmatprep.subr.mxu0 0.0
    %603 = vmatpush1.msra.mxu0 %v570
    %604 = vmatprep.subr.mxu0 0.0
    %605 = vmatpush1.msra.mxu0 %v569
    %606 = vmatprep.subr.mxu0 0.0
    %607 = vmatpush1.msra.mxu0 %v568
    %608 = vmatprep.subr.mxu0 0.0
    %609 = vmatpush1.msra.mxu0 %v567
    %610 = vmatprep.subr.mxu0 0.0
    %611 = vmatpush1.msra.mxu0 %v566
    %612 = vmatprep.subr.mxu0 0.0
    %613 = vmatpush1.msra.mxu0 %v565
    %614 = vmatprep.subr.mxu0 0.0
    %615 = vmatpush1.msra.mxu0 %v564
    %616 = vmatprep.subr.mxu0 0.0
    %617 = vmatpush1.msra.mxu0 %v563
    %618 = vmatprep.subr.mxu0 0.0
    %619 = vmatpush2.msra.mxu0 0.0
    %620 = vmatprep.subr.mxu0 0.0
    %621 = vmatpush2.msra.mxu0 0.0
    %622 = vmatprep.subr.mxu0 0.0
    %623 = vmatpush2.msra.mxu0 0.0
    %624 = vmatprep.subr.mxu0 0.0
    %625 = vmatpush2.msra.mxu0 0.0
    %626 = vmatprep.subr.mxu0 0.0
    %627 = vmatpush2.msra.mxu0 0.0
    %628 = vmatprep.subr.mxu0 0.0
    %629 = vmatpush2.msra.mxu0 0.0
    %630 = vmatprep.subr.mxu0 0.0
    %631 = vmatpush2.msra.mxu0 0.0
    %632 = vmatprep.subr.mxu0 0.0
    %633 = vmatpush2.msra.mxu0 0.0
    %634 = vmatprep.subr.mxu0 0.0
    %635 = vmatpush2.msra.mxu0 0.0
    %636 = vmatprep.subr.mxu0 0.0
    %637 = vmatpush2.msra.mxu0 0.0
    %638 = vmatprep.subr.mxu0 0.0
    %639 = vmatpush2.msra.mxu0 0.0
    %640 = vmatprep.subr.mxu0 0.0
    %641 = vmatpush2.msra.mxu0 0.0
    %642 = vmatprep.subr.mxu0 0.0
    %643 = vmatpush2.msra.mxu0 0.0
    %644 = vmatprep.subr.mxu0 0.0
    %645 = vmatpush2.msra.mxu0 0.0
    %646 = vmatprep.subr.mxu0 0.0
    %647 = vmatpush2.msra.mxu0 0.0
    %648 = vmatprep.subr.mxu0 0.0
    %649 = vmatpush2.msra.mxu0 0.0
    %650 = vmatprep.mubr.f32.mxu0 0.0
    %651 = vmatmul.mubr.f32.gmra.mxu0 %v555
    %v652 = vpop.f32.mrf.mxu0
    %v653 = vadd.f32 %v584, %v652
    %v654 = vpop.f32.mrf.mxu0
    %655 = vmatprep.mubr.f32.mxu0 0.0
    %656 = vmatmul.mubr.f32.gmra.mxu0 %v556
    %v657 = vpop.f32.mrf.mxu0
    %v658 = vadd.f32 %v584, %v657
    %v659 = vpop.f32.mrf.mxu0
    %660 = vmatprep.mubr.f32.mxu0 0.0
    %661 = vmatmul.mubr.f32.gmra.mxu0 %v557
    %v662 = vpop.f32.mrf.mxu0
    %v663 = vadd.f32 %v584, %v662
    %v664 = vpop.f32.mrf.mxu0
    %665 = vmatprep.mubr.f32.mxu0 0.0
    %666 = vmatmul.mubr.f32.gmra.mxu0 %v558
    %v667 = vpop.f32.mrf.mxu0
    %v668 = vadd.f32 %v584, %v667
    %v669 = vpop.f32.mrf.mxu0
    %670 = vmatprep.mubr.f32.mxu0 0.0
    %671 = vmatmul.mubr.f32.gmra.mxu0 %v559
    %v672 = vpop.f32.mrf.mxu0
    %v673 = vadd.f32 %v584, %v672
    %v674 = vpop.f32.mrf.mxu0
    %675 = vmatprep.mubr.f32.mxu0 0.0
    %676 = vmatmul.mubr.f32.gmra.mxu0 %v560
    %v677 = vpop.f32.mrf.mxu0
    %v678 = vadd.f32 %v584, %v677
    %v679 = vpop.f32.mrf.mxu0
    %680 = vmatprep.mubr.f32.mxu0 0.0
    %681 = vmatmul.mubr.f32.gmra.mxu0 %v561
    %v682 = vpop.f32.mrf.mxu0
    %v683 = vadd.f32 %v584, %v682
    %v684 = vpop.f32.mrf.mxu0
    %685 = vmatprep.mubr.f32.mxu0 0.0
    %686 = vmatmul.mubr.f32.gmra.mxu0 %v562
    %v687 = vpop.f32.mrf.mxu0
    %v688 = vadd.f32 %v584, %v687
    %v689 = vpop.f32.mrf.mxu0
    %690 = vdwg.mxu0
    %691 = vst.msk [vmem:[#allocation2] sm:$0xff] %vm425, %v653
    %692 = vst.msk [vmem:[#allocation2 + $0x8] sm:$0xff] %vm425, %v658
    %693 = vst.msk [vmem:[#allocation2 + $0x10] sm:$0xff] %vm425, %v663
    %694 = vst.msk [vmem:[#allocation2 + $0x18] sm:$0xff] %vm425, %v668
    %695 = vst.msk [vmem:[#allocation2 + $0x20] sm:$0xff] %vm425, %v673
    %696 = vst.msk [vmem:[#allocation2 + $0x28] sm:$0xff] %vm425, %v678
    %697 = vst.msk [vmem:[#allocation2 + $0x30] sm:$0xff] %vm425, %v683
    %698 = vst.msk [vmem:[#allocation2 + $0x38] sm:$0xff] %vm425, %v688
    %v699 = vld [vmem:[#allocation2] ss:$32 sm:$0x1]
    %v700 = vld [vmem:[#allocation2] ss:$32 sm:$0x2]
    %v701 = vor.u32 %v699, %v700
    %vm702 = vcmask 58368
    %703 = vst.msk [vmem:[#allocation3] sm:$0x3] %vm702, %v701
    %s704 = scalar_lea.vmem [#allocation2], 1
    %v705 = vld [vmem:[%s704] ss:$32 sm:$0x1]
    %v706 = vld [vmem:[%s704] ss:$32 sm:$0x2]
    %v707 = vor.u32 %v705, %v706
    %v710 = vunpack.c.l.s4 1983009808
    %v711 = vunpack.c.0.s8 %v710
    %v712 = vlaneseq
    %v713 = vshrl.u32 %v712, 7
    %v714 = vsub.s32 %v711, %v713
    %v715 = vrot.slane %v707, %v714
    %716 = vrot.lane.b32.xlu0 %v715, 8
    %v717 = vpop.permute.xlu0 %716
    %vm719 = vcmask 123968
    %720 = vst.msk [vmem:[#allocation3] sm:$0x3] %vm719, %v717
    %s721 = scalar_lea.vmem [#allocation2], 2
    %v722 = vld [vmem:[%s721] ss:$32 sm:$0x1]
    %v723 = vld [vmem:[%s721] ss:$32 sm:$0x2]
    %v724 = vor.u32 %v722, %v723
    %v727 = vunpack.c.l.s4 1983009808
    %v728 = vunpack.c.0.s8 %v727
    %v729 = vlaneseq
    %v730 = vshrl.u32 %v729, 7
    %v731 = vsub.s32 %v728, %v730
    %v732 = vrot.slane %v724, %v731
    %733 = vrot.lane.b32.xlu0 %v732, 16
    %v734 = vpop.permute.xlu0 %733
    %vm736 = vcmask 189568
    %737 = vst.msk [vmem:[#allocation3] sm:$0x3] %vm736, %v734
    %s738 = scalar_lea.vmem [#allocation2], 3
    %v739 = vld [vmem:[%s738] ss:$32 sm:$0x1]
    %v740 = vld [vmem:[%s738] ss:$32 sm:$0x2]
    %v741 = vor.u32 %v739, %v740
    %v744 = vunpack.c.l.s4 1983009808
    %v745 = vunpack.c.0.s8 %v744
    %v746 = vlaneseq
    %v747 = vshrl.u32 %v746, 7
    %v748 = vsub.s32 %v745, %v747
    %v749 = vrot.slane %v741, %v748
    %750 = vrot.lane.b32.xlu0 %v749, 24
    %v751 = vpop.permute.xlu0 %750
    %vm753 = vcmask 255168
    %754 = vst.msk [vmem:[#allocation3] sm:$0x3] %vm753, %v751
    %s755 = scalar_lea.vmem [#allocation2], 4
    %v756 = vld [vmem:[%s755] ss:$32 sm:$0x1]
    %v757 = vld [vmem:[%s755] ss:$32 sm:$0x2]
    %v758 = vor.u32 %v756, %v757
    %v761 = vunpack.c.l.s4 1983009808
    %v762 = vunpack.c.0.s8 %v761
    %v763 = vlaneseq
    %v764 = vshrl.u32 %v763, 7
    %v765 = vsub.s32 %v762, %v764
    %v766 = vrot.slane %v758, %v765
    %767 = vrot.lane.b32.xlu0 %v766, 32
    %v768 = vpop.permute.xlu0 %767
    %vm770 = vcmask 320768
    %771 = vst.msk [vmem:[#allocation3] sm:$0x3] %vm770, %v768
    %s772 = scalar_lea.vmem [#allocation2], 5
    %v773 = vld [vmem:[%s772] ss:$32 sm:$0x1]
    %v774 = vld [vmem:[%s772] ss:$32 sm:$0x2]
    %v775 = vor.u32 %v773, %v774
    %v778 = vunpack.c.l.s4 1983009808
    %v779 = vunpack.c.0.s8 %v778
    %v780 = vlaneseq
    %v781 = vshrl.u32 %v780, 7
    %v782 = vsub.s32 %v779, %v781
    %v783 = vrot.slane %v775, %v782
    %784 = vrot.lane.b32.xlu0 %v783, 40
    %v785 = vpop.permute.xlu0 %784
    %vm787 = vcmask 386368
    %788 = vst.msk [vmem:[#allocation3] sm:$0x3] %vm787, %v785
    %s789 = scalar_lea.vmem [#allocation2], 6
    %v790 = vld [vmem:[%s789] ss:$32 sm:$0x1]
    %v791 = vld [vmem:[%s789] ss:$32 sm:$0x2]
    %v792 = vor.u32 %v790, %v791
    %v795 = vunpack.c.l.s4 1983009808
    %v796 = vunpack.c.0.s8 %v795
    %v797 = vlaneseq
    %v798 = vshrl.u32 %v797, 7
    %v799 = vsub.s32 %v796, %v798
    %v800 = vrot.slane %v792, %v799
    %801 = vrot.lane.b32.xlu0 %v800, 48
    %v802 = vpop.permute.xlu0 %801
    %vm804 = vcmask 451968
    %805 = vst.msk [vmem:[#allocation3] sm:$0x3] %vm804, %v802
    %s806 = scalar_lea.vmem [#allocation2], 7
    %v807 = vld [vmem:[%s806] ss:$32 sm:$0x1]
    %v808 = vld [vmem:[%s806] ss:$32 sm:$0x2]
    %v809 = vor.u32 %v807, %v808
    %v812 = vunpack.c.l.s4 1983009808
    %v813 = vunpack.c.0.s8 %v812
    %v814 = vlaneseq
    %v815 = vshrl.u32 %v814, 7
    %v816 = vsub.s32 %v813, %v815
    %v817 = vrot.slane %v809, %v816
    %818 = vrot.lane.b32.xlu0 %v817, 56
    %v819 = vpop.permute.xlu0 %818
    %vm821 = vcmask 517568
    %822 = vst.msk [vmem:[#allocation3] sm:$0x3] %vm821, %v819
    %s823 = scalar_lea.vmem [#allocation2], 8
    %v824 = vld [vmem:[%s823] ss:$32 sm:$0x1]
    %v825 = vld [vmem:[%s823] ss:$32 sm:$0x2]
    %v826 = vor.u32 %v824, %v825
    %v829 = vunpack.c.l.s4 1983009808
    %v830 = vunpack.c.0.s8 %v829
    %v831 = vlaneseq
    %v832 = vshrl.u32 %v831, 7
    %v833 = vsub.s32 %v830, %v832
    %v834 = vrot.slane %v826, %v833
    %835 = vrot.lane.b32.xlu0 %v834, 64
    %v836 = vpop.permute.xlu0 %835
    %vm838 = vcmask 583168
    %839 = vst.msk [vmem:[#allocation3] sm:$0x3] %vm838, %v836
    %s840 = scalar_lea.vmem [#allocation2], 9
    %v841 = vld [vmem:[%s840] ss:$32 sm:$0x1]
    %v842 = vld [vmem:[%s840] ss:$32 sm:$0x2]
    %v843 = vor.u32 %v841, %v842
    %v846 = vunpack.c.l.s4 1983009808
    %v847 = vunpack.c.0.s8 %v846
    %v848 = vlaneseq
    %v849 = vshrl.u32 %v848, 7
    %v850 = vsub.s32 %v847, %v849
    %v851 = vrot.slane %v843, %v850
    %852 = vrot.lane.b32.xlu0 %v851, 72
    %v853 = vpop.permute.xlu0 %852
    %vm855 = vcmask 648768
    %856 = vst.msk [vmem:[#allocation3] sm:$0x3] %vm855, %v853
    %s857 = scalar_lea.vmem [#allocation2], 10
    %v858 = vld [vmem:[%s857] ss:$32 sm:$0x1]
    %v859 = vld [vmem:[%s857] ss:$32 sm:$0x2]
    %v860 = vor.u32 %v858, %v859
    %v863 = vunpack.c.l.s4 1983009808
    %v864 = vunpack.c.0.s8 %v863
    %v865 = vlaneseq
    %v866 = vshrl.u32 %v865, 7
    %v867 = vsub.s32 %v864, %v866
    %v868 = vrot.slane %v860, %v867
    %869 = vrot.lane.b32.xlu0 %v868, 80
    %v870 = vpop.permute.xlu0 %869
    %vm872 = vcmask 714368
    %873 = vst.msk [vmem:[#allocation3] sm:$0x3] %vm872, %v870
    %s874 = scalar_lea.vmem [#allocation2], 11
    %v875 = vld [vmem:[%s874] ss:$32 sm:$0x1]
    %v876 = vld [vmem:[%s874] ss:$32 sm:$0x2]
    %v877 = vor.u32 %v875, %v876
    %v880 = vunpack.c.l.s4 1983009808
    %v881 = vunpack.c.0.s8 %v880
    %v882 = vlaneseq
    %v883 = vshrl.u32 %v882, 7
    %v884 = vsub.s32 %v881, %v883
    %v885 = vrot.slane %v877, %v884
    %886 = vrot.lane.b32.xlu0 %v885, 88
    %v887 = vpop.permute.xlu0 %886
    %vm889 = vcmask 779968
    %890 = vst.msk [vmem:[#allocation3] sm:$0x3] %vm889, %v887
    %s891 = scalar_lea.vmem [#allocation2], 12
    %v892 = vld [vmem:[%s891] ss:$32 sm:$0x1]
    %v893 = vld [vmem:[%s891] ss:$32 sm:$0x2]
    %v894 = vor.u32 %v892, %v893
    %v897 = vunpack.c.l.s4 1983009808
    %v898 = vunpack.c.0.s8 %v897
    %v899 = vlaneseq
    %v900 = vshrl.u32 %v899, 7
    %v901 = vsub.s32 %v898, %v900
    %v902 = vrot.slane %v894, %v901
    %903 = vrot.lane.b32.xlu0 %v902, 96
    %v904 = vpop.permute.xlu0 %903
    %vm906 = vcmask 845568
    %907 = vst.msk [vmem:[#allocation3] sm:$0x3] %vm906, %v904
    %s908 = scalar_lea.vmem [#allocation2], 13
    %v909 = vld [vmem:[%s908] ss:$32 sm:$0x1]
    %v910 = vld [vmem:[%s908] ss:$32 sm:$0x2]
    %v911 = vor.u32 %v909, %v910
    %v914 = vunpack.c.l.s4 1983009808
    %v915 = vunpack.c.0.s8 %v914
    %v916 = vlaneseq
    %v917 = vshrl.u32 %v916, 7
    %v918 = vsub.s32 %v915, %v917
    %v919 = vrot.slane %v911, %v918
    %920 = vrot.lane.b32.xlu0 %v919, 104
    %v921 = vpop.permute.xlu0 %920
    %vm923 = vcmask 911168
    %924 = vst.msk [vmem:[#allocation3] sm:$0x3] %vm923, %v921
    %s925 = scalar_lea.vmem [#allocation2], 14
    %v926 = vld [vmem:[%s925] ss:$32 sm:$0x1]
    %v927 = vld [vmem:[%s925] ss:$32 sm:$0x2]
    %v928 = vor.u32 %v926, %v927
    %v931 = vunpack.c.l.s4 1983009808
    %v932 = vunpack.c.0.s8 %v931
    %v933 = vlaneseq
    %v934 = vshrl.u32 %v933, 7
    %v935 = vsub.s32 %v932, %v934
    %v936 = vrot.slane %v928, %v935
    %937 = vrot.lane.b32.xlu0 %v936, 112
    %v938 = vpop.permute.xlu0 %937
    %vm940 = vcmask 976768
    %941 = vst.msk [vmem:[#allocation3] sm:$0x3] %vm940, %v938
    %s942 = scalar_lea.vmem [#allocation2], 15
    %v943 = vld [vmem:[%s942] ss:$32 sm:$0x1]
    %v944 = vld [vmem:[%s942] ss:$32 sm:$0x2]
    %v945 = vor.u32 %v943, %v944
    %v948 = vunpack.c.l.s4 1983009808
    %v949 = vunpack.c.0.s8 %v948
    %v950 = vlaneseq
    %v951 = vshrl.u32 %v950, 7
    %v952 = vsub.s32 %v949, %v951
    %v953 = vrot.slane %v945, %v952
    %954 = vrot.lane.b32.xlu0 %v953, 120
    %v955 = vpop.permute.xlu0 %954
    %vm957 = vcmask 1042368
    %958 = vst.msk [vmem:[#allocation3] sm:$0x3] %vm957, %v955
    %s959 = scalar_lea.vmem [#allocation2], 16
    %v960 = vld [vmem:[%s959] ss:$32 sm:$0x1]
    %v961 = vld [vmem:[%s959] ss:$32 sm:$0x2]
    %v962 = vor.u32 %v960, %v961
    %963 = vst.msk [vmem:[#allocation3 + $0x2] sm:$0x3] %vm702, %v962
    %s964 = scalar_lea.vmem [#allocation2], 17
    %v965 = vld [vmem:[%s964] ss:$32 sm:$0x1]
    %v966 = vld [vmem:[%s964] ss:$32 sm:$0x2]
    %v967 = vor.u32 %v965, %v966
    %v970 = vunpack.c.l.s4 1983009808
    %v971 = vunpack.c.0.s8 %v970
    %v972 = vlaneseq
    %v973 = vshrl.u32 %v972, 7
    %v974 = vsub.s32 %v971, %v973
    %v975 = vrot.slane %v967, %v974
    %976 = vrot.lane.b32.xlu0 %v975, 8
    %v977 = vpop.permute.xlu0 %976
    %979 = vst.msk [vmem:[#allocation3 + $0x2] sm:$0x3] %vm719, %v977
    %s980 = scalar_lea.vmem [#allocation2], 18
    %v981 = vld [vmem:[%s980] ss:$32 sm:$0x1]
    %v982 = vld [vmem:[%s980] ss:$32 sm:$0x2]
    %v983 = vor.u32 %v981, %v982
    %v986 = vunpack.c.l.s4 1983009808
    %v987 = vunpack.c.0.s8 %v986
    %v988 = vlaneseq
    %v989 = vshrl.u32 %v988, 7
    %v990 = vsub.s32 %v987, %v989
    %v991 = vrot.slane %v983, %v990
    %992 = vrot.lane.b32.xlu0 %v991, 16
    %v993 = vpop.permute.xlu0 %992
    %995 = vst.msk [vmem:[#allocation3 + $0x2] sm:$0x3] %vm736, %v993
    %s996 = scalar_lea.vmem [#allocation2], 19
    %v997 = vld [vmem:[%s996] ss:$32 sm:$0x1]
    %v998 = vld [vmem:[%s996] ss:$32 sm:$0x2]
    %v999 = vor.u32 %v997, %v998
    %v1002 = vunpack.c.l.s4 1983009808
    %v1003 = vunpack.c.0.s8 %v1002
    %v1004 = vlaneseq
    %v1005 = vshrl.u32 %v1004, 7
    %v1006 = vsub.s32 %v1003, %v1005
    %v1007 = vrot.slane %v999, %v1006
    %1008 = vrot.lane.b32.xlu0 %v1007, 24
    %v1009 = vpop.permute.xlu0 %1008
    %1011 = vst.msk [vmem:[#allocation3 + $0x2] sm:$0x3] %vm753, %v1009
    %s1012 = scalar_lea.vmem [#allocation2], 20
    %v1013 = vld [vmem:[%s1012] ss:$32 sm:$0x1]
    %v1014 = vld [vmem:[%s1012] ss:$32 sm:$0x2]
    %v1015 = vor.u32 %v1013, %v1014
    %v1018 = vunpack.c.l.s4 1983009808
    %v1019 = vunpack.c.0.s8 %v1018
    %v1020 = vlaneseq
    %v1021 = vshrl.u32 %v1020, 7
    %v1022 = vsub.s32 %v1019, %v1021
    %v1023 = vrot.slane %v1015, %v1022
    %1024 = vrot.lane.b32.xlu0 %v1023, 32
    %v1025 = vpop.permute.xlu0 %1024
    %1027 = vst.msk [vmem:[#allocation3 + $0x2] sm:$0x3] %vm770, %v1025
    %s1028 = scalar_lea.vmem [#allocation2], 21
    %v1029 = vld [vmem:[%s1028] ss:$32 sm:$0x1]
    %v1030 = vld [vmem:[%s1028] ss:$32 sm:$0x2]
    %v1031 = vor.u32 %v1029, %v1030
    %v1034 = vunpack.c.l.s4 1983009808
    %v1035 = vunpack.c.0.s8 %v1034
    %v1036 = vlaneseq
    %v1037 = vshrl.u32 %v1036, 7
    %v1038 = vsub.s32 %v1035, %v1037
    %v1039 = vrot.slane %v1031, %v1038
    %1040 = vrot.lane.b32.xlu0 %v1039, 40
    %v1041 = vpop.permute.xlu0 %1040
    %1043 = vst.msk [vmem:[#allocation3 + $0x2] sm:$0x3] %vm787, %v1041
    %s1044 = scalar_lea.vmem [#allocation2], 22
    %v1045 = vld [vmem:[%s1044] ss:$32 sm:$0x1]
    %v1046 = vld [vmem:[%s1044] ss:$32 sm:$0x2]
    %v1047 = vor.u32 %v1045, %v1046
    %v1050 = vunpack.c.l.s4 1983009808
    %v1051 = vunpack.c.0.s8 %v1050
    %v1052 = vlaneseq
    %v1053 = vshrl.u32 %v1052, 7
    %v1054 = vsub.s32 %v1051, %v1053
    %v1055 = vrot.slane %v1047, %v1054
    %1056 = vrot.lane.b32.xlu0 %v1055, 48
    %v1057 = vpop.permute.xlu0 %1056
    %1059 = vst.msk [vmem:[#allocation3 + $0x2] sm:$0x3] %vm804, %v1057
    %s1060 = scalar_lea.vmem [#allocation2], 23
    %v1061 = vld [vmem:[%s1060] ss:$32 sm:$0x1]
    %v1062 = vld [vmem:[%s1060] ss:$32 sm:$0x2]
    %v1063 = vor.u32 %v1061, %v1062
    %v1066 = vunpack.c.l.s4 1983009808
    %v1067 = vunpack.c.0.s8 %v1066
    %v1068 = vlaneseq
    %v1069 = vshrl.u32 %v1068, 7
    %v1070 = vsub.s32 %v1067, %v1069
    %v1071 = vrot.slane %v1063, %v1070
    %1072 = vrot.lane.b32.xlu0 %v1071, 56
    %v1073 = vpop.permute.xlu0 %1072
    %1075 = vst.msk [vmem:[#allocation3 + $0x2] sm:$0x3] %vm821, %v1073
    %s1076 = scalar_lea.vmem [#allocation2], 24
    %v1077 = vld [vmem:[%s1076] ss:$32 sm:$0x1]
    %v1078 = vld [vmem:[%s1076] ss:$32 sm:$0x2]
    %v1079 = vor.u32 %v1077, %v1078
    %v1082 = vunpack.c.l.s4 1983009808
    %v1083 = vunpack.c.0.s8 %v1082
    %v1084 = vlaneseq
    %v1085 = vshrl.u32 %v1084, 7
    %v1086 = vsub.s32 %v1083, %v1085
    %v1087 = vrot.slane %v1079, %v1086
    %1088 = vrot.lane.b32.xlu0 %v1087, 64
    %v1089 = vpop.permute.xlu0 %1088
    %1091 = vst.msk [vmem:[#allocation3 + $0x2] sm:$0x3] %vm838, %v1089
    %s1092 = scalar_lea.vmem [#allocation2], 25
    %v1093 = vld [vmem:[%s1092] ss:$32 sm:$0x1]
    %v1094 = vld [vmem:[%s1092] ss:$32 sm:$0x2]
    %v1095 = vor.u32 %v1093, %v1094
    %v1098 = vunpack.c.l.s4 1983009808
    %v1099 = vunpack.c.0.s8 %v1098
    %v1100 = vlaneseq
    %v1101 = vshrl.u32 %v1100, 7
    %v1102 = vsub.s32 %v1099, %v1101
    %v1103 = vrot.slane %v1095, %v1102
    %1104 = vrot.lane.b32.xlu0 %v1103, 72
    %v1105 = vpop.permute.xlu0 %1104
    %1107 = vst.msk [vmem:[#allocation3 + $0x2] sm:$0x3] %vm855, %v1105
    %s1108 = scalar_lea.vmem [#allocation2], 26
    %v1109 = vld [vmem:[%s1108] ss:$32 sm:$0x1]
    %v1110 = vld [vmem:[%s1108] ss:$32 sm:$0x2]
    %v1111 = vor.u32 %v1109, %v1110
    %v1114 = vunpack.c.l.s4 1983009808
    %v1115 = vunpack.c.0.s8 %v1114
    %v1116 = vlaneseq
    %v1117 = vshrl.u32 %v1116, 7
    %v1118 = vsub.s32 %v1115, %v1117
    %v1119 = vrot.slane %v1111, %v1118
    %1120 = vrot.lane.b32.xlu0 %v1119, 80
    %v1121 = vpop.permute.xlu0 %1120
    %1123 = vst.msk [vmem:[#allocation3 + $0x2] sm:$0x3] %vm872, %v1121
    %s1124 = scalar_lea.vmem [#allocation2], 27
    %v1125 = vld [vmem:[%s1124] ss:$32 sm:$0x1]
    %v1126 = vld [vmem:[%s1124] ss:$32 sm:$0x2]
    %v1127 = vor.u32 %v1125, %v1126
    %v1130 = vunpack.c.l.s4 1983009808
    %v1131 = vunpack.c.0.s8 %v1130
    %v1132 = vlaneseq
    %v1133 = vshrl.u32 %v1132, 7
    %v1134 = vsub.s32 %v1131, %v1133
    %v1135 = vrot.slane %v1127, %v1134
    %1136 = vrot.lane.b32.xlu0 %v1135, 88
    %v1137 = vpop.permute.xlu0 %1136
    %1139 = vst.msk [vmem:[#allocation3 + $0x2] sm:$0x3] %vm889, %v1137
    %s1140 = scalar_lea.vmem [#allocation2], 28
    %v1141 = vld [vmem:[%s1140] ss:$32 sm:$0x1]
    %v1142 = vld [vmem:[%s1140] ss:$32 sm:$0x2]
    %v1143 = vor.u32 %v1141, %v1142
    %v1146 = vunpack.c.l.s4 1983009808
    %v1147 = vunpack.c.0.s8 %v1146
    %v1148 = vlaneseq
    %v1149 = vshrl.u32 %v1148, 7
    %v1150 = vsub.s32 %v1147, %v1149
    %v1151 = vrot.slane %v1143, %v1150
    %1152 = vrot.lane.b32.xlu0 %v1151, 96
    %v1153 = vpop.permute.xlu0 %1152
    %1155 = vst.msk [vmem:[#allocation3 + $0x2] sm:$0x3] %vm906, %v1153
    %s1156 = scalar_lea.vmem [#allocation2], 29
    %v1157 = vld [vmem:[%s1156] ss:$32 sm:$0x1]
    %v1158 = vld [vmem:[%s1156] ss:$32 sm:$0x2]
    %v1159 = vor.u32 %v1157, %v1158
    %v1162 = vunpack.c.l.s4 1983009808
    %v1163 = vunpack.c.0.s8 %v1162
    %v1164 = vlaneseq
    %v1165 = vshrl.u32 %v1164, 7
    %v1166 = vsub.s32 %v1163, %v1165
    %v1167 = vrot.slane %v1159, %v1166
    %1168 = vrot.lane.b32.xlu0 %v1167, 104
    %v1169 = vpop.permute.xlu0 %1168
    %1171 = vst.msk [vmem:[#allocation3 + $0x2] sm:$0x3] %vm923, %v1169
    %s1172 = scalar_lea.vmem [#allocation2], 30
    %v1173 = vld [vmem:[%s1172] ss:$32 sm:$0x1]
    %v1174 = vld [vmem:[%s1172] ss:$32 sm:$0x2]
    %v1175 = vor.u32 %v1173, %v1174
    %v1178 = vunpack.c.l.s4 1983009808
    %v1179 = vunpack.c.0.s8 %v1178
    %v1180 = vlaneseq
    %v1181 = vshrl.u32 %v1180, 7
    %v1182 = vsub.s32 %v1179, %v1181
    %v1183 = vrot.slane %v1175, %v1182
    %1184 = vrot.lane.b32.xlu0 %v1183, 112
    %v1185 = vpop.permute.xlu0 %1184
    %1187 = vst.msk [vmem:[#allocation3 + $0x2] sm:$0x3] %vm940, %v1185
    %s1188 = scalar_lea.vmem [#allocation2], 31
    %v1189 = vld [vmem:[%s1188] ss:$32 sm:$0x1]
    %v1190 = vld [vmem:[%s1188] ss:$32 sm:$0x2]
    %v1191 = vor.u32 %v1189, %v1190
    %v1194 = vunpack.c.l.s4 1983009808
    %v1195 = vunpack.c.0.s8 %v1194
    %v1196 = vlaneseq
    %v1197 = vshrl.u32 %v1196, 7
    %v1198 = vsub.s32 %v1195, %v1197
    %v1199 = vrot.slane %v1191, %v1198
    %1200 = vrot.lane.b32.xlu0 %v1199, 120
    %v1201 = vpop.permute.xlu0 %1200
    %1203 = vst.msk [vmem:[#allocation3 + $0x2] sm:$0x3] %vm957, %v1201
    %v1204 = vld [vmem:[#allocation3] sm:$0xf]
    %s1205 = sld [smem:[#allocation4 + $0x1]]
    %v1206 = vstv %s1205
    %v1207 = vmul.f32 %v1204, %v1206
    %v1208 = vtanh.pop %v1207
    %v1209 = vmul.f32 %v1208, 1.4142135
    %v1210 = vld [vmem:[%s10] sm:$0xff]
    %v1211 = vld [vmem:[%s10 + $0x8] sm:$0xff]
    %v1212 = vld [vmem:[%s10 + $0x10] sm:$0xff]
    %v1213 = vld [vmem:[%s10 + $0x18] sm:$0xff]
    %v1214 = vld [vmem:[%s10 + $0x20] sm:$0xff]
    %v1215 = vld [vmem:[%s10 + $0x28] sm:$0xff]
    %v1216 = vld [vmem:[%s10 + $0x30] sm:$0xff]
    %v1217 = vld [vmem:[%s10 + $0x38] sm:$0xff]
    %v1218 = vld [vmem:[%s10 + $0x40] sm:$0xff]
    %v1219 = vld [vmem:[%s10 + $0x48] sm:$0xff]
    %v1220 = vld [vmem:[%s10 + $0x50] sm:$0xff]
    %v1221 = vld [vmem:[%s10 + $0x58] sm:$0xff]
    %v1222 = vld [vmem:[%s10 + $0x60] sm:$0xff]
    %v1223 = vld [vmem:[%s10 + $0x68] sm:$0xff]
    %v1224 = vld [vmem:[%s10 + $0x70] sm:$0xff]
    %v1225 = vld [vmem:[%s10 + $0x78] sm:$0xff]
    %v1226 = vld [vmem:[%s10 + $0x80] sm:$0xff]
    %v1227 = vld [vmem:[%s10 + $0x88] sm:$0xff]
    %v1228 = vld [vmem:[%s10 + $0x90] sm:$0xff]
    %v1229 = vld [vmem:[%s10 + $0x98] sm:$0xff]
    %v1230 = vld [vmem:[%s10 + $0xa0] sm:$0xff]
    %v1231 = vld [vmem:[%s10 + $0xa8] sm:$0xff]
    %v1232 = vld [vmem:[%s10 + $0xb0] sm:$0xff]
    %v1233 = vld [vmem:[%s10 + $0xb8] sm:$0xff]
    %v1234 = vld [vmem:[%s10 + $0xc0] sm:$0xff]
    %v1235 = vld [vmem:[%s10 + $0xc8] sm:$0xff]
    %v1236 = vld [vmem:[%s10 + $0xd0] sm:$0xff]
    %v1237 = vld [vmem:[%s10 + $0xd8] sm:$0xff]
    %v1238 = vld [vmem:[%s10 + $0xe0] sm:$0xff]
    %v1239 = vld [vmem:[%s10 + $0xe8] sm:$0xff]
    %v1240 = vld [vmem:[%s10 + $0xf0] sm:$0xff]
    %v1241 = vld [vmem:[%s10 + $0xf8] sm:$0xff]
    %v1242 = vld [vmem:[%s11] sm:$0x1]
    %v1244 = vlaneseq
    %v1245 = vshrl.u32 %v1244, 7
    %v1246 = vsub.s32 0, %v1245
    %v1247 = vrot.slane %v1242, %v1246
    %v1251 = vunpack.c.l.s4 1983009808
    %v1252 = vunpack.c.0.s8 %v1251
    %v1253 = vlaneseq
    %v1254 = vshrl.u32 %v1253, 7
    %v1255 = vsub.s32 %v1252, %v1254
    %v1256 = vrot.slane %v1209, %v1255
    %v1257 = vcombine.high %v1256, %v1256
    %1260 = vmatprep.subr.mxu0 0.0
    %1261 = vmatpush1.msra.mxu0 %v1225
    %1262 = vmatprep.subr.mxu0 0.0
    %1263 = vmatpush1.msra.mxu0 %v1224
    %1264 = vmatprep.subr.mxu0 0.0
    %1265 = vmatpush1.msra.mxu0 %v1223
    %1266 = vmatprep.subr.mxu0 0.0
    %1267 = vmatpush1.msra.mxu0 %v1222
    %1268 = vmatprep.subr.mxu0 0.0
    %1269 = vmatpush1.msra.mxu0 %v1221
    %1270 = vmatprep.subr.mxu0 0.0
    %1271 = vmatpush1.msra.mxu0 %v1220
    %1272 = vmatprep.subr.mxu0 0.0
    %1273 = vmatpush1.msra.mxu0 %v1219
    %1274 = vmatprep.subr.mxu0 0.0
    %1275 = vmatpush1.msra.mxu0 %v1218
    %1276 = vmatprep.subr.mxu0 0.0
    %1277 = vmatpush1.msra.mxu0 %v1217
    %1278 = vmatprep.subr.mxu0 0.0
    %1279 = vmatpush1.msra.mxu0 %v1216
    %1280 = vmatprep.subr.mxu0 0.0
    %1281 = vmatpush1.msra.mxu0 %v1215
    %1282 = vmatprep.subr.mxu0 0.0
    %1283 = vmatpush1.msra.mxu0 %v1214
    %1284 = vmatprep.subr.mxu0 0.0
    %1285 = vmatpush1.msra.mxu0 %v1213
    %1286 = vmatprep.subr.mxu0 0.0
    %1287 = vmatpush1.msra.mxu0 %v1212
    %1288 = vmatprep.subr.mxu0 0.0
    %1289 = vmatpush1.msra.mxu0 %v1211
    %1290 = vmatprep.subr.mxu0 0.0
    %1291 = vmatpush1.msra.mxu0 %v1210
    %1292 = vmatprep.subr.mxu0 0.0
    %1293 = vmatpush2.msra.mxu0 %v1241
    %1294 = vmatprep.subr.mxu0 0.0
    %1295 = vmatpush2.msra.mxu0 %v1240
    %1296 = vmatprep.subr.mxu0 0.0
    %1297 = vmatpush2.msra.mxu0 %v1239
    %1298 = vmatprep.subr.mxu0 0.0
    %1299 = vmatpush2.msra.mxu0 %v1238
    %1300 = vmatprep.subr.mxu0 0.0
    %1301 = vmatpush2.msra.mxu0 %v1237
    %1302 = vmatprep.subr.mxu0 0.0
    %1303 = vmatpush2.msra.mxu0 %v1236
    %1304 = vmatprep.subr.mxu0 0.0
    %1305 = vmatpush2.msra.mxu0 %v1235
    %1306 = vmatprep.subr.mxu0 0.0
    %1307 = vmatpush2.msra.mxu0 %v1234
    %1308 = vmatprep.subr.mxu0 0.0
    %1309 = vmatpush2.msra.mxu0 %v1233
    %1310 = vmatprep.subr.mxu0 0.0
    %1311 = vmatpush2.msra.mxu0 %v1232
    %1312 = vmatprep.subr.mxu0 0.0
    %1313 = vmatpush2.msra.mxu0 %v1231
    %1314 = vmatprep.subr.mxu0 0.0
    %1315 = vmatpush2.msra.mxu0 %v1230
    %1316 = vmatprep.subr.mxu0 0.0
    %1317 = vmatpush2.msra.mxu0 %v1229
    %1318 = vmatprep.subr.mxu0 0.0
    %1319 = vmatpush2.msra.mxu0 %v1228
    %1320 = vmatprep.subr.mxu0 0.0
    %1321 = vmatpush2.msra.mxu0 %v1227
    %1322 = vmatprep.subr.mxu0 0.0
    %1323 = vmatpush2.msra.mxu0 %v1226
    %1324 = vmatprep.mubr.f32.mxu0 %v1257
    %1325 = vmatmul.mubr.f32.gmra.mxu0 %v1256
    %v1326 = vpop.f32.mrf.mxu0
    %v1327 = vadd.f32 %v1247, %v1326
    %v1328 = vpop.f32.mrf.mxu0
    %1329 = vdwg.mxu0
    %v1330 = vld [vmem:[%s12] sm:$0x1]
    %v1332 = vlaneseq
    %v1333 = vshrl.u32 %v1332, 7
    %v1334 = vsub.s32 0, %v1333
    %v1335 = vrot.slane %v1330, %v1334
    %v1337 = vmul.f32 %v1327, %v1335
    %v1338 = vtanh.pop %v1337
    %v1339 = vmul.f32 %v1338, 1.4142135
    %1340 = vst [vmem:[#allocation7] sm:$0x3] %v1339
    // Predicated region
    $region58: #{tpu_custom_call.1} parent=1 // pred_check
      _
    $region59: #{tpu_custom_call.1} parent=1 // pred_check_branch
      %1342 = sbr.rel (0) target = $region61
    $region60: #{tpu_custom_call.1} parent=1 // pred_region
      %s1344 = ssub.s32 32, 32
      %1345 = vsyncadd [#allocation5], %s1344
      %s1347 = sshll.u32 [#allocation7], 4
      %s1348 = int_to_ptr.vmem [resolvable:$true] %s1347
      %1350 = dma.vmem_to_hbm [thread:$0]  %s1348, 32, %s13, [#allocation5]
    $region61: #{tpu_custom_call.1} parent=1 // pred_fallthru
      _
    // Predicated region
    $region62: #{tpu_custom_call.1} parent=1 // pred_check
      _
    $region63: #{tpu_custom_call.1} parent=1 // pred_check_branch
      %1352 = sbr.rel (0) target = $region65
    $region64: #{tpu_custom_call.1} parent=1 // pred_region
      %1353 = dma.done [#allocation5], 32
    $region65: #{tpu_custom_call.1} parent=1 // pred_fallthru
      _
    %1354 = vsyncpa [#allocation5], 1
    %1355 = vsyncpa [#allocation6], 1

</llo_original>
